<compile_context>
chip_gen: v5e
topology: v5e:2x2
jax: 0.10.0
libtpu: 0.0.40
codegen_flags: <defaults>
</compile_context>

<pallas_src>
import functools

import jax
import jax.numpy as jnp
import numpy as np
from jax.experimental import pallas as pl
from jax.experimental.pallas import tpu as pltpu

EPS = 1e-5


# ---------------------------------------------------------------------------
# Deterministic parameter construction (stand-in for apply_init)
# ---------------------------------------------------------------------------
def init_linear(key, cout, cin):
    kw, kb = jax.random.split(key)
    return {
        "W": jax.random.normal(kw, (cout, cin), jnp.float32) * 0.1,    # init_fn
        "b": jax.random.uniform(kb, (cout,), jnp.float32, -1.0, 1.0),  # uniform_
    }


def init_bn(c):
    # nn.init.constant_(weight, 1.0), constant_(bias, 0.0); fresh running stats.
    return {"gamma": jnp.ones((c,), jnp.float32),
            "beta": jnp.zeros((c,), jnp.float32),
            "mean": jnp.zeros((c,), jnp.float32),
            "var": jnp.ones((c,), jnp.float32)}


def init_stn(key, in_ch, k_out, ls):
    c0, c1, c2 = ls
    ks = jax.random.split(key, 6)
    return {
        "conv1": init_linear(ks[0], c0, in_ch),
        "conv2": init_linear(ks[1], c1, c0),
        "conv3": init_linear(ks[2], c2, c1),
        "fc1": init_linear(ks[3], c1, c2),
        "fc2": init_linear(ks[4], c0, c1),
        "fc3": init_linear(ks[5], k_out * k_out, c0),
        "bn1": init_bn(c0), "bn2": init_bn(c1), "bn3": init_bn(c2),
        "bn4": init_bn(c1), "bn5": init_bn(c0),
    }


def init_params(key, ls):
    c0, c1, c2 = ls
    ks = jax.random.split(key, 8)
    feat = {
        "stn": init_stn(ks[0], 3, 3, ls),      # STN3d
        "fstn": init_stn(ks[1], c0, c0, ls),   # STNkd(k=c0), feature_transform
        "conv1": init_linear(ks[2], c0, 3),
        "conv2": init_linear(ks[3], c1, c0),
        "conv3": init_linear(ks[4], c2, c1),
        "bn1": init_bn(c0), "bn2": init_bn(c1), "bn3": init_bn(c2),
    }
    return {
        "feat": feat,
        "fc1": init_linear(ks[5], c1, c2),
        "fc2": init_linear(ks[6], c0, c1),
        "fc3": init_linear(ks[7], 1, c0),
        "bn1": init_bn(c1), "bn2": init_bn(c0),
    }


# ---------------------------------------------------------------------------
# Host-side prep (done ONCE): fold eval-mode BN, pre-transpose W, pack all 18
# layers into two lane-padded slabs (2 weight operands instead of 36).
# ---------------------------------------------------------------------------
def _fold(lin, bn=None):
    """Return (W_t, b) with W_t: (Cin, Cout) and eval-mode BatchNorm folded in."""
    W, b = lin["W"], lin["b"]                       # W: (Cout, Cin)
    cout = W.shape[0]
    w_t = W.T.astype(jnp.float32)                   # (Cin, Cout)
    if bn is not None:
        scale = bn["gamma"] * jax.lax.rsqrt(bn["var"] + EPS)   # (Cout,)
        w_t = w_t * scale[None, :]
        b = (b - bn["mean"]) * scale + bn["beta"]
    return w_t, b.reshape(1, cout).astype(jnp.float32)


def prepare_params(params):
    """Pack 18 BN-folded (W_t, b) pairs into W slab (18,32,128) / b slab (18,1,128)."""
    f = params["feat"]

    def stn_layers(s):
        return [_fold(s["conv1"], s["bn1"]), _fold(s["conv2"], s["bn2"]),
                _fold(s["conv3"], s["bn3"]), _fold(s["fc1"], s["bn4"]),
                _fold(s["fc2"], s["bn5"]), _fold(s["fc3"], None)]

    layers = []
    layers += stn_layers(f["stn"])                    # idx 0..5   STN3d
    layers += stn_layers(f["fstn"])                   # idx 6..11  STNkd (k=c0)
    layers += [_fold(f["conv1"], f["bn1"]),           # idx 12
               _fold(f["conv2"], f["bn2"]),           # idx 13
               _fold(f["conv3"], f["bn3"])]           # idx 14
    layers += [_fold(params["fc1"], params["bn1"]),   # idx 15
               _fold(params["fc2"], params["bn2"]),   # idx 16
               _fold(params["fc3"], None)]            # idx 17

    dims = tuple((int(w.shape[0]), int(w.shape[1])) for w, _ in layers)
    n = len(layers)
    sub = ((max(d[0] for d in dims) + 7) // 8) * 8            # pad Cin to sublanes
    lane = max(((max(d[1] for d in dims) + 127) // 128) * 128, 128)  # lane-pad Cout
    w_np = np.zeros((n, sub, lane), np.float32)
    b_np = np.zeros((n, 1, lane), np.float32)
    for i, (w, b) in enumerate(layers):
        cin, cout = dims[i]
        w_np[i, :cin, :cout] = np.asarray(w)
        b_np[i, :, :cout] = np.asarray(b)
    return jnp.asarray(w_np), jnp.asarray(b_np), dims


# ---------------------------------------------------------------------------
# The fused Pallas kernel: whole forward for the whole batch in one grid step
# ---------------------------------------------------------------------------
def _pointnet_dis_kernel(x_ref, w_ref, b_ref, o_ref, *, dims, batch, npts):
    lane = w_ref.shape[-1]

    def dense(x, idx, relu, cout=None):
        cin, cn = dims[idx]
        cout = cn if cout is None else cout
        w = w_ref[idx][:cin, :cout]                  # slice packed slab (VMEM)
        b = b_ref[idx][:, :cout]                     # (1, cout)
        y = jnp.dot(x, w, preferred_element_type=jnp.float32) + b
        return jnp.maximum(y, 0.0) if relu else y

    def pool_rep(h):
        # Per-batch max over the npts rows of each batch; broadcast back so every
        # row carries its batch's pooled feature (keeps everything 2D, tile-aligned).
        c = h.shape[1]
        parts = []
        for bb in range(batch):
            m = jnp.max(h[bb * npts:(bb + 1) * npts], axis=0, keepdims=True)
            parts.append(jnp.broadcast_to(m, (npts, c)))
        return jnp.concatenate(parts, axis=0)        # (batch*npts, c)

    def stn(x, base):
        # STN3d / STNkd: 3 convs -> per-batch max -> 3 fcs -> (R, k*k) replicated
        h = dense(x, base + 0, True)
        h = dense(h, base + 1, True)
        h = dense(h, base + 2, True)
        g = pool_rep(h)
        g = dense(g, base + 3, True)
        g = dense(g, base + 4, True)
        return dense(g, base + 5, False)

    def transform(x, tvec, k):
        # Row-wise x @ (I + T_b): O(k) lane-broadcast MACs, T_b row r = tvec[:, k*r:k*r+k].
        y = x
        for r in range(k):
            y = y + x[:, r:r + 1] * tvec[:, k * r:k * r + k]
        return y

    pts = x_ref[0] - x_ref[1]                        # fused subtract -> (R, 3)

    t3 = stn(pts, 0)                                 # STN3d  -> (R, 9)
    h = dense(transform(pts, t3, 3), 12, True)       # input transform + conv1
    c0 = dims[13][0]
    tk = stn(h, 6)                                   # STNkd  -> (R, c0*c0)
    h = dense(transform(h, tk, c0), 13, True)        # feature transform + conv2
    h = dense(h, 14, False)                          # conv3 (+BN, no relu)
    g = pool_rep(h)                                  # global max-pool (replicated rows)
    y = dense(g, 15, True)                           # fc1 + bn1 + relu
    # TODO(synk): Dropout(p=0.4) is identity in eval mode; training RNG not done.
    y = dense(y, 16, True)                           # fc2 + bn2 + relu
    o_ref[...] = dense(y, 17, False, cout=lane)      # fc3, lane-dense (R, 128) store


def pointnet_forward(w_slab, b_slab, dims, x1, x2):
    """x1, x2: (B, N, 3) -> decoded (B, 1). Single fused pallas_call, grid=(1,)."""
    B, N, _ = x1.shape
    R = B * N
    lane = w_slab.shape[-1]
    # Single point operand; rows ordered (b, n) row-major so row b*N+n <-> batch b.
    x = jnp.stack([x1.reshape(R, 3), x2.reshape(R, 3)], axis=0)   # (2, R, 3)
    kernel = functools.partial(_pointnet_dis_kernel, dims=dims, batch=B, npts=N)
    out = pl.pallas_call(
        kernel,
        out_shape=jax.ShapeDtypeStruct((R, lane), jnp.float32),
        grid=(1,),
        in_specs=[pl.BlockSpec(x.shape, lambda i: (0, 0, 0)),
                  pl.BlockSpec(w_slab.shape, lambda i: (0, 0, 0)),
                  pl.BlockSpec(b_slab.shape, lambda i: (0, 0, 0))],
        out_specs=pl.BlockSpec((R, lane), lambda i: (0, 0)),
        compiler_params=pltpu.CompilerParams(
            dimension_semantics=("arbitrary",)),     # one step: single-TC on purpose
    )(x, w_slab, b_slab)
    # Rows within a batch are identical; take row 0 of each batch, lane 0.
    return out[::N, :1]


# ---------------------------------------------------------------------------
# Module-level forward (mirrors PointNetDisClassifier.forward)
# ---------------------------------------------------------------------------
def make_pointnet_dis_classifier(dims):
    @jax.jit
    def forward(w_slab, b_slab, graph, feat_ind1, feat_ind2):
        edges = graph["edges"].astype(jnp.float32)
        B = edges.shape[0]
        x1 = jnp.take(edges, feat_ind1, axis=1).reshape(B, -1, 3)
        x2 = jnp.take(edges, feat_ind2, axis=1).reshape(B, -1, 3)
        decoded = pointnet_forward(w_slab, b_slab, dims, x1, x2)
        out_graph = dict(graph)
        out_graph["edges"] = decoded                 # replace_graph({'edges': decoded})
        return [out_graph]
    return forward


# ---------------------------------------------------------------------------
# Pure-JAX reference (uses raw params, explicit eval-mode BN) for validation
# ---------------------------------------------------------------------------
def _ref_forward(params, x1, x2):
    def bn(x, p):
        return (x - p["mean"]) * (p["gamma"] * jax.lax.rsqrt(p["var"] + EPS)) + p["beta"]

    def lin(x, p):
        return x @ p["W"].T + p["b"]

    def stn_ref(x, s, k):
        h = jax.nn.relu(bn(lin(x, s["conv1"]), s["bn1"]))
        h = jax.nn.relu(bn(lin(h, s["conv2"]), s["bn2"]))
        h = jax.nn.relu(bn(lin(h, s["conv3"]), s["bn3"]))
        g = jnp.max(h, axis=1)
        g = jax.nn.relu(bn(lin(g, s["fc1"]), s["bn4"]))
        g = jax.nn.relu(bn(lin(g, s["fc2"]), s["bn5"]))
        t = lin(g, s["fc3"])
        return t.reshape(-1, k, k) + jnp.eye(k, dtype=t.dtype)

    f = params["feat"]
    pts = x1 - x2
    trans = stn_ref(pts, f["stn"], 3)
    h = jnp.einsum("bnd,bdk->bnk", pts, trans)
    h = jax.nn.relu(bn(lin(h, f["conv1"]), f["bn1"]))
    trans_f = stn_ref(h, f["fstn"], h.shape[-1])
    h = jnp.einsum("bnd,bdk->bnk", h, trans_f)
    h = jax.nn.relu(bn(lin(h, f["conv2"]), f["bn2"]))
    h = bn(lin(h, f["conv3"]), f["bn3"])
    g = jnp.max(h, axis=1)
    y = jax.nn.relu(bn(lin(g, params["fc1"]), params["bn1"]))
    y = jax.nn.relu(bn(lin(y, params["fc2"]), params["bn2"]))   # dropout = identity
    return lin(y, params["fc3"])


# ---------------------------------------------------------------------------
if __name__ == "__main__":
    key = jax.random.PRNGKey(0)
    k_edges, k_nodes, k_params = jax.random.split(key, 3)

    pointnet_ls_list = [8, 16, 32]   # [c0, c1, c2]
    B = 4                            # number of edges (batch for this module)
    N = 8                            # points per object slice (len(feat_ind)/3)
    edge_feat_dim = 6 * N            # 48
    feat_ind1 = jnp.arange(0, 3 * N, dtype=jnp.int32)
    feat_ind2 = jnp.arange(3 * N, 6 * N, dtype=jnp.int32)

    graph = {
        "edges": jax.random.normal(k_edges, (B, edge_feat_dim), jnp.float32),
        "nodes": jax.random.normal(k_nodes, (3, 5), jnp.float32),
    }
    params = init_params(k_params, pointnet_ls_list)
    w_slab, b_slab, dims = prepare_params(params)    # BN folded, packed, once

    forward = make_pointnet_dis_classifier(dims)
    out = forward(w_slab, b_slab, graph, feat_ind1, feat_ind2)
    decoded = out[0]["edges"]
    jax.block_until_ready(decoded)

    assert decoded.shape == (B, 1) and decoded.dtype == jnp.float32
    assert bool(jnp.all(jnp.isfinite(decoded)))

    # Validate against the pure-JAX reference (loose tol: f32-on-MXU rounding).
    x1 = jnp.take(graph["edges"], feat_ind1, axis=1).reshape(B, -1, 3)
    x2 = jnp.take(graph["edges"], feat_ind2, axis=1).reshape(B, -1, 3)
    ref = _ref_forward(params, x1, x2)
    assert bool(jnp.allclose(decoded, ref, atol=2e-3, rtol=2e-3))

    print("KERNEL_OK")
</pallas_src>

<mosaic_0001>
module attributes {stable_mosaic.version = 11 : i64} {
  func.func @_pointnet_dis_kernel(%arg0: i32, %arg1: memref<2x32x3xf32, #tpu.memory_space<vmem>>, %arg2: memref<18x32x128xf32, #tpu.memory_space<vmem>>, %arg3: memref<18x1x128xf32, #tpu.memory_space<vmem>>, %arg4: memref<32x128xf32, #tpu.memory_space<vmem>>) attributes {dimension_semantics = [#tpu.dimension_semantics<arbitrary>], iteration_bounds = array<i64: 1>, scalar_prefetch = 0 : i64, scratch_operands = 0 : i64, tpu.core_type = #tpu.core_type<tc>, window_params = [{pipeline_mode = #tpu.pipeline_mode<synchronous>, transform_indices = @transform_0, window_bounds = array<i64: 2, 32, 3>}, {pipeline_mode = #tpu.pipeline_mode<synchronous>, transform_indices = @transform_1, window_bounds = array<i64: 18, 32, 128>}, {pipeline_mode = #tpu.pipeline_mode<synchronous>, transform_indices = @transform_2, window_bounds = array<i64: 18, 1, 128>}, {pipeline_mode = #tpu.pipeline_mode<synchronous>, transform_indices = @transform_3, window_bounds = array<i64: 32, 128>}]} {
    %c0 = arith.constant 0 : index
    %c0_0 = arith.constant 0 : index
    %c0_1 = arith.constant 0 : index
    %0 = vector.load %arg1[%c0, %c0_0, %c0_1] : memref<2x32x3xf32, #tpu.memory_space<vmem>>, vector<1x32x3xf32>
    %1 = vector.shape_cast %0 : vector<1x32x3xf32> to vector<32x3xf32>
    %c1 = arith.constant 1 : index
    %c0_2 = arith.constant 0 : index
    %c0_3 = arith.constant 0 : index
    %2 = vector.load %arg1[%c1, %c0_2, %c0_3] : memref<2x32x3xf32, #tpu.memory_space<vmem>>, vector<1x32x3xf32>
    %3 = vector.shape_cast %2 : vector<1x32x3xf32> to vector<32x3xf32>
    %4 = arith.subf %1, %3 : vector<32x3xf32>
    %c0_4 = arith.constant 0 : index
    %c0_5 = arith.constant 0 : index
    %c0_6 = arith.constant 0 : index
    %5 = vector.load %arg2[%c0_4, %c0_5, %c0_6] : memref<18x32x128xf32, #tpu.memory_space<vmem>>, vector<1x32x128xf32>
    %6 = vector.shape_cast %5 : vector<1x32x128xf32> to vector<32x128xf32>
    %7 = vector.extract_strided_slice %6 {offsets = [0, 0], sizes = [3, 8], strides = [1, 1]} : vector<32x128xf32> to vector<3x8xf32>
    %c0_7 = arith.constant 0 : index
    %c0_8 = arith.constant 0 : index
    %c0_9 = arith.constant 0 : index
    %8 = vector.load %arg3[%c0_7, %c0_8, %c0_9] : memref<18x1x128xf32, #tpu.memory_space<vmem>>, vector<1x1x128xf32>
    %9 = vector.shape_cast %8 : vector<1x1x128xf32> to vector<1x128xf32>
    %10 = vector.extract_strided_slice %9 {offsets = [0, 0], sizes = [1, 8], strides = [1, 1]} : vector<1x128xf32> to vector<1x8xf32>
    %cst = arith.constant dense<0.000000e+00> : vector<32x8xf32>
    %11 = tpu.matmul %4, %7, %cst {dimension_numbers = #tpu.dot_dimension_numbers<[1], [0], [0], [1], [0, 0, 1, 1], [], []>} : vector<32x3xf32>, vector<3x8xf32>, vector<32x8xf32> -> vector<32x8xf32>
    %12 = vector.broadcast %10 : vector<1x8xf32> to vector<32x8xf32>
    %13 = arith.addf %11, %12 : vector<32x8xf32>
    %cst_10 = arith.constant 0.000000e+00 : f32
    %14 = vector.broadcast %cst_10 : f32 to vector<32x8xf32>
    %15 = arith.maximumf %13, %14 : vector<32x8xf32>
    %c1_11 = arith.constant 1 : index
    %c0_12 = arith.constant 0 : index
    %c0_13 = arith.constant 0 : index
    %16 = vector.load %arg2[%c1_11, %c0_12, %c0_13] : memref<18x32x128xf32, #tpu.memory_space<vmem>>, vector<1x32x128xf32>
    %17 = vector.shape_cast %16 : vector<1x32x128xf32> to vector<32x128xf32>
    %18 = vector.extract_strided_slice %17 {offsets = [0, 0], sizes = [8, 16], strides = [1, 1]} : vector<32x128xf32> to vector<8x16xf32>
    %c1_14 = arith.constant 1 : index
    %c0_15 = arith.constant 0 : index
    %c0_16 = arith.constant 0 : index
    %19 = vector.load %arg3[%c1_14, %c0_15, %c0_16] : memref<18x1x128xf32, #tpu.memory_space<vmem>>, vector<1x1x128xf32>
    %20 = vector.shape_cast %19 : vector<1x1x128xf32> to vector<1x128xf32>
    %21 = vector.extract_strided_slice %20 {offsets = [0, 0], sizes = [1, 16], strides = [1, 1]} : vector<1x128xf32> to vector<1x16xf32>
    %cst_17 = arith.constant dense<0.000000e+00> : vector<32x16xf32>
    %22 = tpu.matmul %15, %18, %cst_17 {dimension_numbers = #tpu.dot_dimension_numbers<[1], [0], [0], [1], [0, 0, 1, 1], [], []>} : vector<32x8xf32>, vector<8x16xf32>, vector<32x16xf32> -> vector<32x16xf32>
    %23 = vector.broadcast %21 : vector<1x16xf32> to vector<32x16xf32>
    %24 = arith.addf %22, %23 : vector<32x16xf32>
    %cst_18 = arith.constant 0.000000e+00 : f32
    %25 = vector.broadcast %cst_18 : f32 to vector<32x16xf32>
    %26 = arith.maximumf %24, %25 : vector<32x16xf32>
    %c2 = arith.constant 2 : index
    %c0_19 = arith.constant 0 : index
    %c0_20 = arith.constant 0 : index
    %27 = vector.load %arg2[%c2, %c0_19, %c0_20] : memref<18x32x128xf32, #tpu.memory_space<vmem>>, vector<1x32x128xf32>
    %28 = vector.shape_cast %27 : vector<1x32x128xf32> to vector<32x128xf32>
    %29 = vector.extract_strided_slice %28 {offsets = [0, 0], sizes = [16, 32], strides = [1, 1]} : vector<32x128xf32> to vector<16x32xf32>
    %c2_21 = arith.constant 2 : index
    %c0_22 = arith.constant 0 : index
    %c0_23 = arith.constant 0 : index
    %30 = vector.load %arg3[%c2_21, %c0_22, %c0_23] : memref<18x1x128xf32, #tpu.memory_space<vmem>>, vector<1x1x128xf32>
    %31 = vector.shape_cast %30 : vector<1x1x128xf32> to vector<1x128xf32>
    %32 = vector.extract_strided_slice %31 {offsets = [0, 0], sizes = [1, 32], strides = [1, 1]} : vector<1x128xf32> to vector<1x32xf32>
    %cst_24 = arith.constant dense<0.000000e+00> : vector<32x32xf32>
    %33 = tpu.matmul %26, %29, %cst_24 {dimension_numbers = #tpu.dot_dimension_numbers<[1], [0], [0], [1], [0, 0, 1, 1], [], []>} : vector<32x16xf32>, vector<16x32xf32>, vector<32x32xf32> -> vector<32x32xf32>
    %34 = vector.broadcast %32 : vector<1x32xf32> to vector<32x32xf32>
    %35 = arith.addf %33, %34 : vector<32x32xf32>
    %cst_25 = arith.constant 0.000000e+00 : f32
    %36 = vector.broadcast %cst_25 : f32 to vector<32x32xf32>
    %37 = arith.maximumf %35, %36 : vector<32x32xf32>
    %38 = vector.extract_strided_slice %37 {offsets = [0, 0], sizes = [8, 32], strides = [1, 1]} : vector<32x32xf32> to vector<8x32xf32>
    %cst_26 = arith.constant dense<0xFF800000> : vector<32xf32>
    %39 = vector.multi_reduction <maximumf>, %38, %cst_26 [0] : vector<8x32xf32> to vector<32xf32>
    %40 = vector.shape_cast %39 : vector<32xf32> to vector<1x32xf32>
    %41 = vector.shape_cast %40 : vector<1x32xf32> to vector<1x32xf32>
    %42 = vector.broadcast %41 : vector<1x32xf32> to vector<8x32xf32>
    %43 = vector.extract_strided_slice %37 {offsets = [8, 0], sizes = [8, 32], strides = [1, 1]} : vector<32x32xf32> to vector<8x32xf32>
    %cst_27 = arith.constant dense<0xFF800000> : vector<32xf32>
    %44 = vector.multi_reduction <maximumf>, %43, %cst_27 [0] : vector<8x32xf32> to vector<32xf32>
    %45 = vector.shape_cast %44 : vector<32xf32> to vector<1x32xf32>
    %46 = vector.shape_cast %45 : vector<1x32xf32> to vector<1x32xf32>
    %47 = vector.broadcast %46 : vector<1x32xf32> to vector<8x32xf32>
    %48 = vector.extract_strided_slice %37 {offsets = [16, 0], sizes = [8, 32], strides = [1, 1]} : vector<32x32xf32> to vector<8x32xf32>
    %cst_28 = arith.constant dense<0xFF800000> : vector<32xf32>
    %49 = vector.multi_reduction <maximumf>, %48, %cst_28 [0] : vector<8x32xf32> to vector<32xf32>
    %50 = vector.shape_cast %49 : vector<32xf32> to vector<1x32xf32>
    %51 = vector.shape_cast %50 : vector<1x32xf32> to vector<1x32xf32>
    %52 = vector.broadcast %51 : vector<1x32xf32> to vector<8x32xf32>
    %53 = vector.extract_strided_slice %37 {offsets = [24, 0], sizes = [8, 32], strides = [1, 1]} : vector<32x32xf32> to vector<8x32xf32>
    %cst_29 = arith.constant dense<0xFF800000> : vector<32xf32>
    %54 = vector.multi_reduction <maximumf>, %53, %cst_29 [0] : vector<8x32xf32> to vector<32xf32>
    %55 = vector.shape_cast %54 : vector<32xf32> to vector<1x32xf32>
    %56 = vector.shape_cast %55 : vector<1x32xf32> to vector<1x32xf32>
    %57 = vector.broadcast %56 : vector<1x32xf32> to vector<8x32xf32>
    %58 = tpu.concatenate %42, %47, %52, %57 in 0 : vector<8x32xf32>, vector<8x32xf32>, vector<8x32xf32>, vector<8x32xf32> -> vector<32x32xf32>
    %c3 = arith.constant 3 : index
    %c0_30 = arith.constant 0 : index
    %c0_31 = arith.constant 0 : index
    %59 = vector.load %arg2[%c3, %c0_30, %c0_31] : memref<18x32x128xf32, #tpu.memory_space<vmem>>, vector<1x32x128xf32>
    %60 = vector.shape_cast %59 : vector<1x32x128xf32> to vector<32x128xf32>
    %61 = vector.extract_strided_slice %60 {offsets = [0, 0], sizes = [32, 16], strides = [1, 1]} : vector<32x128xf32> to vector<32x16xf32>
    %c3_32 = arith.constant 3 : index
    %c0_33 = arith.constant 0 : index
    %c0_34 = arith.constant 0 : index
    %62 = vector.load %arg3[%c3_32, %c0_33, %c0_34] : memref<18x1x128xf32, #tpu.memory_space<vmem>>, vector<1x1x128xf32>
    %63 = vector.shape_cast %62 : vector<1x1x128xf32> to vector<1x128xf32>
    %64 = vector.extract_strided_slice %63 {offsets = [0, 0], sizes = [1, 16], strides = [1, 1]} : vector<1x128xf32> to vector<1x16xf32>
    %cst_35 = arith.constant dense<0.000000e+00> : vector<32x16xf32>
    %65 = tpu.matmul %58, %61, %cst_35 {dimension_numbers = #tpu.dot_dimension_numbers<[1], [0], [0], [1], [0, 0, 1, 1], [], []>} : vector<32x32xf32>, vector<32x16xf32>, vector<32x16xf32> -> vector<32x16xf32>
    %66 = vector.broadcast %64 : vector<1x16xf32> to vector<32x16xf32>
    %67 = arith.addf %65, %66 : vector<32x16xf32>
    %cst_36 = arith.constant 0.000000e+00 : f32
    %68 = vector.broadcast %cst_36 : f32 to vector<32x16xf32>
    %69 = arith.maximumf %67, %68 : vector<32x16xf32>
    %c4 = arith.constant 4 : index
    %c0_37 = arith.constant 0 : index
    %c0_38 = arith.constant 0 : index
    %70 = vector.load %arg2[%c4, %c0_37, %c0_38] : memref<18x32x128xf32, #tpu.memory_space<vmem>>, vector<1x32x128xf32>
    %71 = vector.shape_cast %70 : vector<1x32x128xf32> to vector<32x128xf32>
    %72 = vector.extract_strided_slice %71 {offsets = [0, 0], sizes = [16, 8], strides = [1, 1]} : vector<32x128xf32> to vector<16x8xf32>
    %c4_39 = arith.constant 4 : index
    %c0_40 = arith.constant 0 : index
    %c0_41 = arith.constant 0 : index
    %73 = vector.load %arg3[%c4_39, %c0_40, %c0_41] : memref<18x1x128xf32, #tpu.memory_space<vmem>>, vector<1x1x128xf32>
    %74 = vector.shape_cast %73 : vector<1x1x128xf32> to vector<1x128xf32>
    %75 = vector.extract_strided_slice %74 {offsets = [0, 0], sizes = [1, 8], strides = [1, 1]} : vector<1x128xf32> to vector<1x8xf32>
    %cst_42 = arith.constant dense<0.000000e+00> : vector<32x8xf32>
    %76 = tpu.matmul %69, %72, %cst_42 {dimension_numbers = #tpu.dot_dimension_numbers<[1], [0], [0], [1], [0, 0, 1, 1], [], []>} : vector<32x16xf32>, vector<16x8xf32>, vector<32x8xf32> -> vector<32x8xf32>
    %77 = vector.broadcast %75 : vector<1x8xf32> to vector<32x8xf32>
    %78 = arith.addf %76, %77 : vector<32x8xf32>
    %cst_43 = arith.constant 0.000000e+00 : f32
    %79 = vector.broadcast %cst_43 : f32 to vector<32x8xf32>
    %80 = arith.maximumf %78, %79 : vector<32x8xf32>
    %c5 = arith.constant 5 : index
    %c0_44 = arith.constant 0 : index
    %c0_45 = arith.constant 0 : index
    %81 = vector.load %arg2[%c5, %c0_44, %c0_45] : memref<18x32x128xf32, #tpu.memory_space<vmem>>, vector<1x32x128xf32>
    %82 = vector.shape_cast %81 : vector<1x32x128xf32> to vector<32x128xf32>
    %83 = vector.extract_strided_slice %82 {offsets = [0, 0], sizes = [8, 9], strides = [1, 1]} : vector<32x128xf32> to vector<8x9xf32>
    %c5_46 = arith.constant 5 : index
    %c0_47 = arith.constant 0 : index
    %c0_48 = arith.constant 0 : index
    %84 = vector.load %arg3[%c5_46, %c0_47, %c0_48] : memref<18x1x128xf32, #tpu.memory_space<vmem>>, vector<1x1x128xf32>
    %85 = vector.shape_cast %84 : vector<1x1x128xf32> to vector<1x128xf32>
    %86 = vector.extract_strided_slice %85 {offsets = [0, 0], sizes = [1, 9], strides = [1, 1]} : vector<1x128xf32> to vector<1x9xf32>
    %cst_49 = arith.constant dense<0.000000e+00> : vector<32x9xf32>
    %87 = tpu.matmul %80, %83, %cst_49 {dimension_numbers = #tpu.dot_dimension_numbers<[1], [0], [0], [1], [0, 0, 1, 1], [], []>} : vector<32x8xf32>, vector<8x9xf32>, vector<32x9xf32> -> vector<32x9xf32>
    %88 = vector.broadcast %86 : vector<1x9xf32> to vector<32x9xf32>
    %89 = arith.addf %87, %88 : vector<32x9xf32>
    %90 = vector.extract_strided_slice %4 {offsets = [0, 0], sizes = [32, 1], strides = [1, 1]} : vector<32x3xf32> to vector<32x1xf32>
    %91 = vector.extract_strided_slice %89 {offsets = [0, 0], sizes = [32, 3], strides = [1, 1]} : vector<32x9xf32> to vector<32x3xf32>
    %92 = vector.broadcast %90 : vector<32x1xf32> to vector<32x3xf32>
    %93 = arith.mulf %92, %91 : vector<32x3xf32>
    %94 = arith.addf %4, %93 : vector<32x3xf32>
    %95 = vector.extract_strided_slice %4 {offsets = [0, 1], sizes = [32, 1], strides = [1, 1]} : vector<32x3xf32> to vector<32x1xf32>
    %96 = vector.extract_strided_slice %89 {offsets = [0, 3], sizes = [32, 3], strides = [1, 1]} : vector<32x9xf32> to vector<32x3xf32>
    %97 = vector.broadcast %95 : vector<32x1xf32> to vector<32x3xf32>
    %98 = arith.mulf %97, %96 : vector<32x3xf32>
    %99 = arith.addf %94, %98 : vector<32x3xf32>
    %100 = vector.extract_strided_slice %4 {offsets = [0, 2], sizes = [32, 1], strides = [1, 1]} : vector<32x3xf32> to vector<32x1xf32>
    %101 = vector.extract_strided_slice %89 {offsets = [0, 6], sizes = [32, 3], strides = [1, 1]} : vector<32x9xf32> to vector<32x3xf32>
    %102 = vector.broadcast %100 : vector<32x1xf32> to vector<32x3xf32>
    %103 = arith.mulf %102, %101 : vector<32x3xf32>
    %104 = arith.addf %99, %103 : vector<32x3xf32>
    %c12 = arith.constant 12 : index
    %c0_50 = arith.constant 0 : index
    %c0_51 = arith.constant 0 : index
    %105 = vector.load %arg2[%c12, %c0_50, %c0_51] : memref<18x32x128xf32, #tpu.memory_space<vmem>>, vector<1x32x128xf32>
    %106 = vector.shape_cast %105 : vector<1x32x128xf32> to vector<32x128xf32>
    %107 = vector.extract_strided_slice %106 {offsets = [0, 0], sizes = [3, 8], strides = [1, 1]} : vector<32x128xf32> to vector<3x8xf32>
    %c12_52 = arith.constant 12 : index
    %c0_53 = arith.constant 0 : index
    %c0_54 = arith.constant 0 : index
    %108 = vector.load %arg3[%c12_52, %c0_53, %c0_54] : memref<18x1x128xf32, #tpu.memory_space<vmem>>, vector<1x1x128xf32>
    %109 = vector.shape_cast %108 : vector<1x1x128xf32> to vector<1x128xf32>
    %110 = vector.extract_strided_slice %109 {offsets = [0, 0], sizes = [1, 8], strides = [1, 1]} : vector<1x128xf32> to vector<1x8xf32>
    %cst_55 = arith.constant dense<0.000000e+00> : vector<32x8xf32>
    %111 = tpu.matmul %104, %107, %cst_55 {dimension_numbers = #tpu.dot_dimension_numbers<[1], [0], [0], [1], [0, 0, 1, 1], [], []>} : vector<32x3xf32>, vector<3x8xf32>, vector<32x8xf32> -> vector<32x8xf32>
    %112 = vector.broadcast %110 : vector<1x8xf32> to vector<32x8xf32>
    %113 = arith.addf %111, %112 : vector<32x8xf32>
    %cst_56 = arith.constant 0.000000e+00 : f32
    %114 = vector.broadcast %cst_56 : f32 to vector<32x8xf32>
    %115 = arith.maximumf %113, %114 : vector<32x8xf32>
    %c6 = arith.constant 6 : index
    %c0_57 = arith.constant 0 : index
    %c0_58 = arith.constant 0 : index
    %116 = vector.load %arg2[%c6, %c0_57, %c0_58] : memref<18x32x128xf32, #tpu.memory_space<vmem>>, vector<1x32x128xf32>
    %117 = vector.shape_cast %116 : vector<1x32x128xf32> to vector<32x128xf32>
    %118 = vector.extract_strided_slice %117 {offsets = [0, 0], sizes = [8, 8], strides = [1, 1]} : vector<32x128xf32> to vector<8x8xf32>
    %c6_59 = arith.constant 6 : index
    %c0_60 = arith.constant 0 : index
    %c0_61 = arith.constant 0 : index
    %119 = vector.load %arg3[%c6_59, %c0_60, %c0_61] : memref<18x1x128xf32, #tpu.memory_space<vmem>>, vector<1x1x128xf32>
    %120 = vector.shape_cast %119 : vector<1x1x128xf32> to vector<1x128xf32>
    %121 = vector.extract_strided_slice %120 {offsets = [0, 0], sizes = [1, 8], strides = [1, 1]} : vector<1x128xf32> to vector<1x8xf32>
    %cst_62 = arith.constant dense<0.000000e+00> : vector<32x8xf32>
    %122 = tpu.matmul %115, %118, %cst_62 {dimension_numbers = #tpu.dot_dimension_numbers<[1], [0], [0], [1], [0, 0, 1, 1], [], []>} : vector<32x8xf32>, vector<8x8xf32>, vector<32x8xf32> -> vector<32x8xf32>
    %123 = vector.broadcast %121 : vector<1x8xf32> to vector<32x8xf32>
    %124 = arith.addf %122, %123 : vector<32x8xf32>
    %cst_63 = arith.constant 0.000000e+00 : f32
    %125 = vector.broadcast %cst_63 : f32 to vector<32x8xf32>
    %126 = arith.maximumf %124, %125 : vector<32x8xf32>
    %c7 = arith.constant 7 : index
    %c0_64 = arith.constant 0 : index
    %c0_65 = arith.constant 0 : index
    %127 = vector.load %arg2[%c7, %c0_64, %c0_65] : memref<18x32x128xf32, #tpu.memory_space<vmem>>, vector<1x32x128xf32>
    %128 = vector.shape_cast %127 : vector<1x32x128xf32> to vector<32x128xf32>
    %129 = vector.extract_strided_slice %128 {offsets = [0, 0], sizes = [8, 16], strides = [1, 1]} : vector<32x128xf32> to vector<8x16xf32>
    %c7_66 = arith.constant 7 : index
    %c0_67 = arith.constant 0 : index
    %c0_68 = arith.constant 0 : index
    %130 = vector.load %arg3[%c7_66, %c0_67, %c0_68] : memref<18x1x128xf32, #tpu.memory_space<vmem>>, vector<1x1x128xf32>
    %131 = vector.shape_cast %130 : vector<1x1x128xf32> to vector<1x128xf32>
    %132 = vector.extract_strided_slice %131 {offsets = [0, 0], sizes = [1, 16], strides = [1, 1]} : vector<1x128xf32> to vector<1x16xf32>
    %cst_69 = arith.constant dense<0.000000e+00> : vector<32x16xf32>
    %133 = tpu.matmul %126, %129, %cst_69 {dimension_numbers = #tpu.dot_dimension_numbers<[1], [0], [0], [1], [0, 0, 1, 1], [], []>} : vector<32x8xf32>, vector<8x16xf32>, vector<32x16xf32> -> vector<32x16xf32>
    %134 = vector.broadcast %132 : vector<1x16xf32> to vector<32x16xf32>
    %135 = arith.addf %133, %134 : vector<32x16xf32>
    %cst_70 = arith.constant 0.000000e+00 : f32
    %136 = vector.broadcast %cst_70 : f32 to vector<32x16xf32>
    %137 = arith.maximumf %135, %136 : vector<32x16xf32>
    %c8 = arith.constant 8 : index
    %c0_71 = arith.constant 0 : index
    %c0_72 = arith.constant 0 : index
    %138 = vector.load %arg2[%c8, %c0_71, %c0_72] : memref<18x32x128xf32, #tpu.memory_space<vmem>>, vector<1x32x128xf32>
    %139 = vector.shape_cast %138 : vector<1x32x128xf32> to vector<32x128xf32>
    %140 = vector.extract_strided_slice %139 {offsets = [0, 0], sizes = [16, 32], strides = [1, 1]} : vector<32x128xf32> to vector<16x32xf32>
    %c8_73 = arith.constant 8 : index
    %c0_74 = arith.constant 0 : index
    %c0_75 = arith.constant 0 : index
    %141 = vector.load %arg3[%c8_73, %c0_74, %c0_75] : memref<18x1x128xf32, #tpu.memory_space<vmem>>, vector<1x1x128xf32>
    %142 = vector.shape_cast %141 : vector<1x1x128xf32> to vector<1x128xf32>
    %143 = vector.extract_strided_slice %142 {offsets = [0, 0], sizes = [1, 32], strides = [1, 1]} : vector<1x128xf32> to vector<1x32xf32>
    %cst_76 = arith.constant dense<0.000000e+00> : vector<32x32xf32>
    %144 = tpu.matmul %137, %140, %cst_76 {dimension_numbers = #tpu.dot_dimension_numbers<[1], [0], [0], [1], [0, 0, 1, 1], [], []>} : vector<32x16xf32>, vector<16x32xf32>, vector<32x32xf32> -> vector<32x32xf32>
    %145 = vector.broadcast %143 : vector<1x32xf32> to vector<32x32xf32>
    %146 = arith.addf %144, %145 : vector<32x32xf32>
    %cst_77 = arith.constant 0.000000e+00 : f32
    %147 = vector.broadcast %cst_77 : f32 to vector<32x32xf32>
    %148 = arith.maximumf %146, %147 : vector<32x32xf32>
    %149 = vector.extract_strided_slice %148 {offsets = [0, 0], sizes = [8, 32], strides = [1, 1]} : vector<32x32xf32> to vector<8x32xf32>
    %cst_78 = arith.constant dense<0xFF800000> : vector<32xf32>
    %150 = vector.multi_reduction <maximumf>, %149, %cst_78 [0] : vector<8x32xf32> to vector<32xf32>
    %151 = vector.shape_cast %150 : vector<32xf32> to vector<1x32xf32>
    %152 = vector.shape_cast %151 : vector<1x32xf32> to vector<1x32xf32>
    %153 = vector.broadcast %152 : vector<1x32xf32> to vector<8x32xf32>
    %154 = vector.extract_strided_slice %148 {offsets = [8, 0], sizes = [8, 32], strides = [1, 1]} : vector<32x32xf32> to vector<8x32xf32>
    %cst_79 = arith.constant dense<0xFF800000> : vector<32xf32>
    %155 = vector.multi_reduction <maximumf>, %154, %cst_79 [0] : vector<8x32xf32> to vector<32xf32>
    %156 = vector.shape_cast %155 : vector<32xf32> to vector<1x32xf32>
    %157 = vector.shape_cast %156 : vector<1x32xf32> to vector<1x32xf32>
    %158 = vector.broadcast %157 : vector<1x32xf32> to vector<8x32xf32>
    %159 = vector.extract_strided_slice %148 {offsets = [16, 0], sizes = [8, 32], strides = [1, 1]} : vector<32x32xf32> to vector<8x32xf32>
    %cst_80 = arith.constant dense<0xFF800000> : vector<32xf32>
    %160 = vector.multi_reduction <maximumf>, %159, %cst_80 [0] : vector<8x32xf32> to vector<32xf32>
    %161 = vector.shape_cast %160 : vector<32xf32> to vector<1x32xf32>
    %162 = vector.shape_cast %161 : vector<1x32xf32> to vector<1x32xf32>
    %163 = vector.broadcast %162 : vector<1x32xf32> to vector<8x32xf32>
    %164 = vector.extract_strided_slice %148 {offsets = [24, 0], sizes = [8, 32], strides = [1, 1]} : vector<32x32xf32> to vector<8x32xf32>
    %cst_81 = arith.constant dense<0xFF800000> : vector<32xf32>
    %165 = vector.multi_reduction <maximumf>, %164, %cst_81 [0] : vector<8x32xf32> to vector<32xf32>
    %166 = vector.shape_cast %165 : vector<32xf32> to vector<1x32xf32>
    %167 = vector.shape_cast %166 : vector<1x32xf32> to vector<1x32xf32>
    %168 = vector.broadcast %167 : vector<1x32xf32> to vector<8x32xf32>
    %169 = tpu.concatenate %153, %158, %163, %168 in 0 : vector<8x32xf32>, vector<8x32xf32>, vector<8x32xf32>, vector<8x32xf32> -> vector<32x32xf32>
    %c9 = arith.constant 9 : index
    %c0_82 = arith.constant 0 : index
    %c0_83 = arith.constant 0 : index
    %170 = vector.load %arg2[%c9, %c0_82, %c0_83] : memref<18x32x128xf32, #tpu.memory_space<vmem>>, vector<1x32x128xf32>
    %171 = vector.shape_cast %170 : vector<1x32x128xf32> to vector<32x128xf32>
    %172 = vector.extract_strided_slice %171 {offsets = [0, 0], sizes = [32, 16], strides = [1, 1]} : vector<32x128xf32> to vector<32x16xf32>
    %c9_84 = arith.constant 9 : index
    %c0_85 = arith.constant 0 : index
    %c0_86 = arith.constant 0 : index
    %173 = vector.load %arg3[%c9_84, %c0_85, %c0_86] : memref<18x1x128xf32, #tpu.memory_space<vmem>>, vector<1x1x128xf32>
    %174 = vector.shape_cast %173 : vector<1x1x128xf32> to vector<1x128xf32>
    %175 = vector.extract_strided_slice %174 {offsets = [0, 0], sizes = [1, 16], strides = [1, 1]} : vector<1x128xf32> to vector<1x16xf32>
    %cst_87 = arith.constant dense<0.000000e+00> : vector<32x16xf32>
    %176 = tpu.matmul %169, %172, %cst_87 {dimension_numbers = #tpu.dot_dimension_numbers<[1], [0], [0], [1], [0, 0, 1, 1], [], []>} : vector<32x32xf32>, vector<32x16xf32>, vector<32x16xf32> -> vector<32x16xf32>
    %177 = vector.broadcast %175 : vector<1x16xf32> to vector<32x16xf32>
    %178 = arith.addf %176, %177 : vector<32x16xf32>
    %cst_88 = arith.constant 0.000000e+00 : f32
    %179 = vector.broadcast %cst_88 : f32 to vector<32x16xf32>
    %180 = arith.maximumf %178, %179 : vector<32x16xf32>
    %c10 = arith.constant 10 : index
    %c0_89 = arith.constant 0 : index
    %c0_90 = arith.constant 0 : index
    %181 = vector.load %arg2[%c10, %c0_89, %c0_90] : memref<18x32x128xf32, #tpu.memory_space<vmem>>, vector<1x32x128xf32>
    %182 = vector.shape_cast %181 : vector<1x32x128xf32> to vector<32x128xf32>
    %183 = vector.extract_strided_slice %182 {offsets = [0, 0], sizes = [16, 8], strides = [1, 1]} : vector<32x128xf32> to vector<16x8xf32>
    %c10_91 = arith.constant 10 : index
    %c0_92 = arith.constant 0 : index
    %c0_93 = arith.constant 0 : index
    %184 = vector.load %arg3[%c10_91, %c0_92, %c0_93] : memref<18x1x128xf32, #tpu.memory_space<vmem>>, vector<1x1x128xf32>
    %185 = vector.shape_cast %184 : vector<1x1x128xf32> to vector<1x128xf32>
    %186 = vector.extract_strided_slice %185 {offsets = [0, 0], sizes = [1, 8], strides = [1, 1]} : vector<1x128xf32> to vector<1x8xf32>
    %cst_94 = arith.constant dense<0.000000e+00> : vector<32x8xf32>
    %187 = tpu.matmul %180, %183, %cst_94 {dimension_numbers = #tpu.dot_dimension_numbers<[1], [0], [0], [1], [0, 0, 1, 1], [], []>} : vector<32x16xf32>, vector<16x8xf32>, vector<32x8xf32> -> vector<32x8xf32>
    %188 = vector.broadcast %186 : vector<1x8xf32> to vector<32x8xf32>
    %189 = arith.addf %187, %188 : vector<32x8xf32>
    %cst_95 = arith.constant 0.000000e+00 : f32
    %190 = vector.broadcast %cst_95 : f32 to vector<32x8xf32>
    %191 = arith.maximumf %189, %190 : vector<32x8xf32>
    %c11 = arith.constant 11 : index
    %c0_96 = arith.constant 0 : index
    %c0_97 = arith.constant 0 : index
    %192 = vector.load %arg2[%c11, %c0_96, %c0_97] : memref<18x32x128xf32, #tpu.memory_space<vmem>>, vector<1x32x128xf32>
    %193 = vector.shape_cast %192 : vector<1x32x128xf32> to vector<32x128xf32>
    %194 = vector.extract_strided_slice %193 {offsets = [0, 0], sizes = [8, 64], strides = [1, 1]} : vector<32x128xf32> to vector<8x64xf32>
    %c11_98 = arith.constant 11 : index
    %c0_99 = arith.constant 0 : index
    %c0_100 = arith.constant 0 : index
    %195 = vector.load %arg3[%c11_98, %c0_99, %c0_100] : memref<18x1x128xf32, #tpu.memory_space<vmem>>, vector<1x1x128xf32>
    %196 = vector.shape_cast %195 : vector<1x1x128xf32> to vector<1x128xf32>
    %197 = vector.extract_strided_slice %196 {offsets = [0, 0], sizes = [1, 64], strides = [1, 1]} : vector<1x128xf32> to vector<1x64xf32>
    %cst_101 = arith.constant dense<0.000000e+00> : vector<32x64xf32>
    %198 = tpu.matmul %191, %194, %cst_101 {dimension_numbers = #tpu.dot_dimension_numbers<[1], [0], [0], [1], [0, 0, 1, 1], [], []>} : vector<32x8xf32>, vector<8x64xf32>, vector<32x64xf32> -> vector<32x64xf32>
    %199 = vector.broadcast %197 : vector<1x64xf32> to vector<32x64xf32>
    %200 = arith.addf %198, %199 : vector<32x64xf32>
    %201 = vector.extract_strided_slice %115 {offsets = [0, 0], sizes = [32, 1], strides = [1, 1]} : vector<32x8xf32> to vector<32x1xf32>
    %202 = vector.extract_strided_slice %200 {offsets = [0, 0], sizes = [32, 8], strides = [1, 1]} : vector<32x64xf32> to vector<32x8xf32>
    %203 = vector.broadcast %201 : vector<32x1xf32> to vector<32x8xf32>
    %204 = arith.mulf %203, %202 : vector<32x8xf32>
    %205 = arith.addf %115, %204 : vector<32x8xf32>
    %206 = vector.extract_strided_slice %115 {offsets = [0, 1], sizes = [32, 1], strides = [1, 1]} : vector<32x8xf32> to vector<32x1xf32>
    %207 = vector.extract_strided_slice %200 {offsets = [0, 8], sizes = [32, 8], strides = [1, 1]} : vector<32x64xf32> to vector<32x8xf32>
    %208 = vector.broadcast %206 : vector<32x1xf32> to vector<32x8xf32>
    %209 = arith.mulf %208, %207 : vector<32x8xf32>
    %210 = arith.addf %205, %209 : vector<32x8xf32>
    %211 = vector.extract_strided_slice %115 {offsets = [0, 2], sizes = [32, 1], strides = [1, 1]} : vector<32x8xf32> to vector<32x1xf32>
    %212 = vector.extract_strided_slice %200 {offsets = [0, 16], sizes = [32, 8], strides = [1, 1]} : vector<32x64xf32> to vector<32x8xf32>
    %213 = vector.broadcast %211 : vector<32x1xf32> to vector<32x8xf32>
    %214 = arith.mulf %213, %212 : vector<32x8xf32>
    %215 = arith.addf %210, %214 : vector<32x8xf32>
    %216 = vector.extract_strided_slice %115 {offsets = [0, 3], sizes = [32, 1], strides = [1, 1]} : vector<32x8xf32> to vector<32x1xf32>
    %217 = vector.extract_strided_slice %200 {offsets = [0, 24], sizes = [32, 8], strides = [1, 1]} : vector<32x64xf32> to vector<32x8xf32>
    %218 = vector.broadcast %216 : vector<32x1xf32> to vector<32x8xf32>
    %219 = arith.mulf %218, %217 : vector<32x8xf32>
    %220 = arith.addf %215, %219 : vector<32x8xf32>
    %221 = vector.extract_strided_slice %115 {offsets = [0, 4], sizes = [32, 1], strides = [1, 1]} : vector<32x8xf32> to vector<32x1xf32>
    %222 = vector.extract_strided_slice %200 {offsets = [0, 32], sizes = [32, 8], strides = [1, 1]} : vector<32x64xf32> to vector<32x8xf32>
    %223 = vector.broadcast %221 : vector<32x1xf32> to vector<32x8xf32>
    %224 = arith.mulf %223, %222 : vector<32x8xf32>
    %225 = arith.addf %220, %224 : vector<32x8xf32>
    %226 = vector.extract_strided_slice %115 {offsets = [0, 5], sizes = [32, 1], strides = [1, 1]} : vector<32x8xf32> to vector<32x1xf32>
    %227 = vector.extract_strided_slice %200 {offsets = [0, 40], sizes = [32, 8], strides = [1, 1]} : vector<32x64xf32> to vector<32x8xf32>
    %228 = vector.broadcast %226 : vector<32x1xf32> to vector<32x8xf32>
    %229 = arith.mulf %228, %227 : vector<32x8xf32>
    %230 = arith.addf %225, %229 : vector<32x8xf32>
    %231 = vector.extract_strided_slice %115 {offsets = [0, 6], sizes = [32, 1], strides = [1, 1]} : vector<32x8xf32> to vector<32x1xf32>
    %232 = vector.extract_strided_slice %200 {offsets = [0, 48], sizes = [32, 8], strides = [1, 1]} : vector<32x64xf32> to vector<32x8xf32>
    %233 = vector.broadcast %231 : vector<32x1xf32> to vector<32x8xf32>
    %234 = arith.mulf %233, %232 : vector<32x8xf32>
    %235 = arith.addf %230, %234 : vector<32x8xf32>
    %236 = vector.extract_strided_slice %115 {offsets = [0, 7], sizes = [32, 1], strides = [1, 1]} : vector<32x8xf32> to vector<32x1xf32>
    %237 = vector.extract_strided_slice %200 {offsets = [0, 56], sizes = [32, 8], strides = [1, 1]} : vector<32x64xf32> to vector<32x8xf32>
    %238 = vector.broadcast %236 : vector<32x1xf32> to vector<32x8xf32>
    %239 = arith.mulf %238, %237 : vector<32x8xf32>
    %240 = arith.addf %235, %239 : vector<32x8xf32>
    %c13 = arith.constant 13 : index
    %c0_102 = arith.constant 0 : index
    %c0_103 = arith.constant 0 : index
    %241 = vector.load %arg2[%c13, %c0_102, %c0_103] : memref<18x32x128xf32, #tpu.memory_space<vmem>>, vector<1x32x128xf32>
    %242 = vector.shape_cast %241 : vector<1x32x128xf32> to vector<32x128xf32>
    %243 = vector.extract_strided_slice %242 {offsets = [0, 0], sizes = [8, 16], strides = [1, 1]} : vector<32x128xf32> to vector<8x16xf32>
    %c13_104 = arith.constant 13 : index
    %c0_105 = arith.constant 0 : index
    %c0_106 = arith.constant 0 : index
    %244 = vector.load %arg3[%c13_104, %c0_105, %c0_106] : memref<18x1x128xf32, #tpu.memory_space<vmem>>, vector<1x1x128xf32>
    %245 = vector.shape_cast %244 : vector<1x1x128xf32> to vector<1x128xf32>
    %246 = vector.extract_strided_slice %245 {offsets = [0, 0], sizes = [1, 16], strides = [1, 1]} : vector<1x128xf32> to vector<1x16xf32>
    %cst_107 = arith.constant dense<0.000000e+00> : vector<32x16xf32>
    %247 = tpu.matmul %240, %243, %cst_107 {dimension_numbers = #tpu.dot_dimension_numbers<[1], [0], [0], [1], [0, 0, 1, 1], [], []>} : vector<32x8xf32>, vector<8x16xf32>, vector<32x16xf32> -> vector<32x16xf32>
    %248 = vector.broadcast %246 : vector<1x16xf32> to vector<32x16xf32>
    %249 = arith.addf %247, %248 : vector<32x16xf32>
    %cst_108 = arith.constant 0.000000e+00 : f32
    %250 = vector.broadcast %cst_108 : f32 to vector<32x16xf32>
    %251 = arith.maximumf %249, %250 : vector<32x16xf32>
    %c14 = arith.constant 14 : index
    %c0_109 = arith.constant 0 : index
    %c0_110 = arith.constant 0 : index
    %252 = vector.load %arg2[%c14, %c0_109, %c0_110] : memref<18x32x128xf32, #tpu.memory_space<vmem>>, vector<1x32x128xf32>
    %253 = vector.shape_cast %252 : vector<1x32x128xf32> to vector<32x128xf32>
    %254 = vector.extract_strided_slice %253 {offsets = [0, 0], sizes = [16, 32], strides = [1, 1]} : vector<32x128xf32> to vector<16x32xf32>
    %c14_111 = arith.constant 14 : index
    %c0_112 = arith.constant 0 : index
    %c0_113 = arith.constant 0 : index
    %255 = vector.load %arg3[%c14_111, %c0_112, %c0_113] : memref<18x1x128xf32, #tpu.memory_space<vmem>>, vector<1x1x128xf32>
    %256 = vector.shape_cast %255 : vector<1x1x128xf32> to vector<1x128xf32>
    %257 = vector.extract_strided_slice %256 {offsets = [0, 0], sizes = [1, 32], strides = [1, 1]} : vector<1x128xf32> to vector<1x32xf32>
    %cst_114 = arith.constant dense<0.000000e+00> : vector<32x32xf32>
    %258 = tpu.matmul %251, %254, %cst_114 {dimension_numbers = #tpu.dot_dimension_numbers<[1], [0], [0], [1], [0, 0, 1, 1], [], []>} : vector<32x16xf32>, vector<16x32xf32>, vector<32x32xf32> -> vector<32x32xf32>
    %259 = vector.broadcast %257 : vector<1x32xf32> to vector<32x32xf32>
    %260 = arith.addf %258, %259 : vector<32x32xf32>
    %261 = vector.extract_strided_slice %260 {offsets = [0, 0], sizes = [8, 32], strides = [1, 1]} : vector<32x32xf32> to vector<8x32xf32>
    %cst_115 = arith.constant dense<0xFF800000> : vector<32xf32>
    %262 = vector.multi_reduction <maximumf>, %261, %cst_115 [0] : vector<8x32xf32> to vector<32xf32>
    %263 = vector.shape_cast %262 : vector<32xf32> to vector<1x32xf32>
    %264 = vector.shape_cast %263 : vector<1x32xf32> to vector<1x32xf32>
    %265 = vector.broadcast %264 : vector<1x32xf32> to vector<8x32xf32>
    %266 = vector.extract_strided_slice %260 {offsets = [8, 0], sizes = [8, 32], strides = [1, 1]} : vector<32x32xf32> to vector<8x32xf32>
    %cst_116 = arith.constant dense<0xFF800000> : vector<32xf32>
    %267 = vector.multi_reduction <maximumf>, %266, %cst_116 [0] : vector<8x32xf32> to vector<32xf32>
    %268 = vector.shape_cast %267 : vector<32xf32> to vector<1x32xf32>
    %269 = vector.shape_cast %268 : vector<1x32xf32> to vector<1x32xf32>
    %270 = vector.broadcast %269 : vector<1x32xf32> to vector<8x32xf32>
    %271 = vector.extract_strided_slice %260 {offsets = [16, 0], sizes = [8, 32], strides = [1, 1]} : vector<32x32xf32> to vector<8x32xf32>
    %cst_117 = arith.constant dense<0xFF800000> : vector<32xf32>
    %272 = vector.multi_reduction <maximumf>, %271, %cst_117 [0] : vector<8x32xf32> to vector<32xf32>
    %273 = vector.shape_cast %272 : vector<32xf32> to vector<1x32xf32>
    %274 = vector.shape_cast %273 : vector<1x32xf32> to vector<1x32xf32>
    %275 = vector.broadcast %274 : vector<1x32xf32> to vector<8x32xf32>
    %276 = vector.extract_strided_slice %260 {offsets = [24, 0], sizes = [8, 32], strides = [1, 1]} : vector<32x32xf32> to vector<8x32xf32>
    %cst_118 = arith.constant dense<0xFF800000> : vector<32xf32>
    %277 = vector.multi_reduction <maximumf>, %276, %cst_118 [0] : vector<8x32xf32> to vector<32xf32>
    %278 = vector.shape_cast %277 : vector<32xf32> to vector<1x32xf32>
    %279 = vector.shape_cast %278 : vector<1x32xf32> to vector<1x32xf32>
    %280 = vector.broadcast %279 : vector<1x32xf32> to vector<8x32xf32>
    %281 = tpu.concatenate %265, %270, %275, %280 in 0 : vector<8x32xf32>, vector<8x32xf32>, vector<8x32xf32>, vector<8x32xf32> -> vector<32x32xf32>
    %c15 = arith.constant 15 : index
    %c0_119 = arith.constant 0 : index
    %c0_120 = arith.constant 0 : index
    %282 = vector.load %arg2[%c15, %c0_119, %c0_120] : memref<18x32x128xf32, #tpu.memory_space<vmem>>, vector<1x32x128xf32>
    %283 = vector.shape_cast %282 : vector<1x32x128xf32> to vector<32x128xf32>
    %284 = vector.extract_strided_slice %283 {offsets = [0, 0], sizes = [32, 16], strides = [1, 1]} : vector<32x128xf32> to vector<32x16xf32>
    %c15_121 = arith.constant 15 : index
    %c0_122 = arith.constant 0 : index
    %c0_123 = arith.constant 0 : index
    %285 = vector.load %arg3[%c15_121, %c0_122, %c0_123] : memref<18x1x128xf32, #tpu.memory_space<vmem>>, vector<1x1x128xf32>
    %286 = vector.shape_cast %285 : vector<1x1x128xf32> to vector<1x128xf32>
    %287 = vector.extract_strided_slice %286 {offsets = [0, 0], sizes = [1, 16], strides = [1, 1]} : vector<1x128xf32> to vector<1x16xf32>
    %cst_124 = arith.constant dense<0.000000e+00> : vector<32x16xf32>
    %288 = tpu.matmul %281, %284, %cst_124 {dimension_numbers = #tpu.dot_dimension_numbers<[1], [0], [0], [1], [0, 0, 1, 1], [], []>} : vector<32x32xf32>, vector<32x16xf32>, vector<32x16xf32> -> vector<32x16xf32>
    %289 = vector.broadcast %287 : vector<1x16xf32> to vector<32x16xf32>
    %290 = arith.addf %288, %289 : vector<32x16xf32>
    %cst_125 = arith.constant 0.000000e+00 : f32
    %291 = vector.broadcast %cst_125 : f32 to vector<32x16xf32>
    %292 = arith.maximumf %290, %291 : vector<32x16xf32>
    %c16 = arith.constant 16 : index
    %c0_126 = arith.constant 0 : index
    %c0_127 = arith.constant 0 : index
    %293 = vector.load %arg2[%c16, %c0_126, %c0_127] : memref<18x32x128xf32, #tpu.memory_space<vmem>>, vector<1x32x128xf32>
    %294 = vector.shape_cast %293 : vector<1x32x128xf32> to vector<32x128xf32>
    %295 = vector.extract_strided_slice %294 {offsets = [0, 0], sizes = [16, 8], strides = [1, 1]} : vector<32x128xf32> to vector<16x8xf32>
    %c16_128 = arith.constant 16 : index
    %c0_129 = arith.constant 0 : index
    %c0_130 = arith.constant 0 : index
    %296 = vector.load %arg3[%c16_128, %c0_129, %c0_130] : memref<18x1x128xf32, #tpu.memory_space<vmem>>, vector<1x1x128xf32>
    %297 = vector.shape_cast %296 : vector<1x1x128xf32> to vector<1x128xf32>
    %298 = vector.extract_strided_slice %297 {offsets = [0, 0], sizes = [1, 8], strides = [1, 1]} : vector<1x128xf32> to vector<1x8xf32>
    %cst_131 = arith.constant dense<0.000000e+00> : vector<32x8xf32>
    %299 = tpu.matmul %292, %295, %cst_131 {dimension_numbers = #tpu.dot_dimension_numbers<[1], [0], [0], [1], [0, 0, 1, 1], [], []>} : vector<32x16xf32>, vector<16x8xf32>, vector<32x8xf32> -> vector<32x8xf32>
    %300 = vector.broadcast %298 : vector<1x8xf32> to vector<32x8xf32>
    %301 = arith.addf %299, %300 : vector<32x8xf32>
    %cst_132 = arith.constant 0.000000e+00 : f32
    %302 = vector.broadcast %cst_132 : f32 to vector<32x8xf32>
    %303 = arith.maximumf %301, %302 : vector<32x8xf32>
    %c17 = arith.constant 17 : index
    %c0_133 = arith.constant 0 : index
    %c0_134 = arith.constant 0 : index
    %304 = vector.load %arg2[%c17, %c0_133, %c0_134] : memref<18x32x128xf32, #tpu.memory_space<vmem>>, vector<1x32x128xf32>
    %305 = vector.shape_cast %304 : vector<1x32x128xf32> to vector<32x128xf32>
    %306 = vector.extract_strided_slice %305 {offsets = [0, 0], sizes = [8, 128], strides = [1, 1]} : vector<32x128xf32> to vector<8x128xf32>
    %c17_135 = arith.constant 17 : index
    %c0_136 = arith.constant 0 : index
    %c0_137 = arith.constant 0 : index
    %307 = vector.load %arg3[%c17_135, %c0_136, %c0_137] : memref<18x1x128xf32, #tpu.memory_space<vmem>>, vector<1x1x128xf32>
    %308 = vector.shape_cast %307 : vector<1x1x128xf32> to vector<1x128xf32>
    %cst_138 = arith.constant dense<0.000000e+00> : vector<32x128xf32>
    %309 = tpu.matmul %303, %306, %cst_138 {dimension_numbers = #tpu.dot_dimension_numbers<[1], [0], [0], [1], [0, 0, 1, 1], [], []>} : vector<32x8xf32>, vector<8x128xf32>, vector<32x128xf32> -> vector<32x128xf32>
    %310 = vector.broadcast %308 : vector<1x128xf32> to vector<32x128xf32>
    %311 = arith.addf %309, %310 : vector<32x128xf32>
    %c0_139 = arith.constant 0 : index
    %c0_140 = arith.constant 0 : index
    %312 = vector.load %arg4[%c0_139, %c0_140] : memref<32x128xf32, #tpu.memory_space<vmem>>, vector<32x128xf32>
    tpu.vector_store %arg4[%c0_139, %c0_140], %311 {strides = array<i32>} : memref<32x128xf32, #tpu.memory_space<vmem>>, vector<32x128xf32>,
    return
  }
  func.func @transform_0(%arg0: i32) -> (i32, i32, i32) {
    %c0_i32 = arith.constant 0 : i32
    %c0_i32_0 = arith.constant 0 : i32
    %c0_i32_1 = arith.constant 0 : i32
    %c0_i32_2 = arith.constant 0 : i32
    return %c0_i32, %c0_i32_0, %c0_i32_1 : i32, i32, i32
  }
  func.func @transform_1(%arg0: i32) -> (i32, i32, i32) {
    %c0_i32 = arith.constant 0 : i32
    %c0_i32_0 = arith.constant 0 : i32
    %c0_i32_1 = arith.constant 0 : i32
    %c0_i32_2 = arith.constant 0 : i32
    return %c0_i32, %c0_i32_0, %c0_i32_1 : i32, i32, i32
  }
  func.func @transform_2(%arg0: i32) -> (i32, i32, i32) {
    %c0_i32 = arith.constant 0 : i32
    %c0_i32_0 = arith.constant 0 : i32
    %c0_i32_1 = arith.constant 0 : i32
    %c0_i32_2 = arith.constant 0 : i32
    return %c0_i32, %c0_i32_0, %c0_i32_1 : i32, i32, i32
  }
  func.func @transform_3(%arg0: i32) -> (i32, i32) {
    %c0_i32 = arith.constant 0 : i32
    %c0_i32_0 = arith.constant 0 : i32
    %c0_i32_1 = arith.constant 0 : i32
    return %c0_i32, %c0_i32_0 : i32, i32
  }
}

</mosaic_0001>

<llo_original>
// kernel: forward.1
$region0: #{forward.1}
  #allocation0 [shape = 'u32[]', space=smem, size = 0x4, offset = 0x4, fixed_abs, tag = 'smem constant byte address 0x4 - core index']
  #allocation1 [shape = 'u32[72,128]{1,0:T(1,128)}', space=vmem, size = 0x9000, scoped, tag = 'internal scratch']
  %s0 = inlined_call_operand.vmem [shape: f32[2,32,3], index: 0, kind: input, shape index: {}]
  %s1 = inlined_call_operand.hbm [shape: f32[18,32,128], index: 1, kind: input, shape index: {}]
  %s2 = inlined_call_operand.vmem [shape: f32[18,1,128], index: 2, kind: input, shape index: {}]
  %s3 = inlined_call_operand.vmem [shape: f32[32,128], index: 3, kind: output, shape index: {}]
  %s4 = sld [smem:[#allocation0]]
  $region26: #{forward.1} parent=0
    _
  %s6 = ssub.s32 1, %s4
  %s7 = scalar_select 0, %s6, %s4
  $region1: #{forward.1} parent=0
    #allocation2 [shape = 'u8[294912]{0}', space=vmem, size = 0x48000, scoped, tag = 'input window, operand 1, single buffered']
    #allocation3 [shape = 's32[1]{0}', space=sflag, size = 0x4, scoped, tag = 'scoped memory for forward.1']
    %8 = vsyncpa [#allocation3], 0
    // Predicated region
    $region2: #{forward.1} parent=1 // pred_check
      _
    $region3: #{forward.1} parent=1 // pred_check_branch
      %10 = sbr.rel (0) target = $region5
    $region4: #{forward.1} parent=1 // pred_region
      _
    $region5: #{forward.1} parent=1 // pred_fallthru
      _
    // Predicated region
    $region6: #{forward.1} parent=1 // pred_check
      _
    $region7: #{forward.1} parent=1 // pred_check_branch
      %12 = sbr.rel (0) target = $region9
    $region8: #{forward.1} parent=1 // pred_region
      %14 = vsyncadd [#allocation3], 0
      %s15 = sshll.u32 %s1, 4
      %s16 = int_to_ptr.hbm [resolvable:$true] %s15
      %s17 = sshll.u32 [#allocation2], 4
      %s18 = int_to_ptr.vmem [resolvable:$true] %s17
      %23 = dma.hbm_to_vmem [thread:$0]  %s16, 9216, %s18, [#allocation3], 128, 128, 8
    $region9: #{forward.1} parent=1 // pred_fallthru
      _
    // Predicated region
    $region10: #{forward.1} parent=1 // pred_check
      _
    $region11: #{forward.1} parent=1 // pred_check_branch
      %25 = sbr.rel (0) target = $region13
    $region12: #{forward.1} parent=1 // pred_region
      _
    $region13: #{forward.1} parent=1 // pred_fallthru
      _
    // Predicated region
    $region14: #{forward.1} parent=1 // pred_check
      _
    $region15: #{forward.1} parent=1 // pred_check_branch
      %27 = sbr.rel (0) target = $region17
    $region16: #{forward.1} parent=1 // pred_region
      %29 = dma.done [#allocation3], 9216
    $region17: #{forward.1} parent=1 // pred_fallthru
      _
    %v30 = vld [vmem:[%s0] sm:$0xff]
    %v31 = vld [vmem:[%s0 + $0x8] sm:$0xff]
    %v32 = vld [vmem:[%s0 + $0x10] sm:$0xff]
    %v33 = vld [vmem:[%s0 + $0x18] sm:$0xff]
    %s34 = scalar_lea.vmem %s0, 32
    %v35 = vld [vmem:[%s34] sm:$0xff]
    %v36 = vld [vmem:[%s34 + $0x8] sm:$0xff]
    %v37 = vld [vmem:[%s34 + $0x10] sm:$0xff]
    %v38 = vld [vmem:[%s34 + $0x18] sm:$0xff]
    %v39 = vsub.f32 %v30, %v35
    %v40 = vsub.f32 %v31, %v36
    %v41 = vsub.f32 %v32, %v37
    %v42 = vsub.f32 %v33, %v38
    %v43 = vld [vmem:[#allocation2] sm:$0xff]
    %v44 = vld [vmem:[%s2] sm:$0x1]
    %v46 = vperm.slane %v44, 0
    %vm48 = vcmask 23552
    %v50 = vsel %vm48, %v39, 0
    %v53 = vsel %vm48, %v40, 0
    %v56 = vsel %vm48, %v41, 0
    %v59 = vsel %vm48, %v42, 0
    %vm61 = vcmask 1042432
    %v63 = vsel %vm61, %v43, 0
    %65 = vmatpush.msra.mxu0 0.0
    %66 = vmatpush.msra.mxu0 0.0
    %67 = vmatpush.msra.mxu0 0.0
    %68 = vmatpush.msra.mxu0 0.0
    %69 = vmatpush.msra.mxu0 0.0
    %70 = vmatpush.msra.mxu0 0.0
    %71 = vmatpush.msra.mxu0 0.0
    %72 = vmatpush.msra.mxu0 0.0
    %73 = vmatpush.msra.mxu0 0.0
    %74 = vmatpush.msra.mxu0 0.0
    %75 = vmatpush.msra.mxu0 0.0
    %76 = vmatpush.msra.mxu0 0.0
    %77 = vmatpush.msra.mxu0 0.0
    %78 = vmatpush.msra.mxu0 0.0
    %79 = vmatpush.msra.mxu0 0.0
    %80 = vmatpush.msra.mxu0 %v63
    %81 = vmatmul.f32.gmra.mxu0 %v50
    %v82 = vpop.f32.mrf.mxu0
    %v83 = vadd.f32 %v46, %v82
    %84 = vmatmul.f32.gmra.mxu0 %v53
    %v85 = vpop.f32.mrf.mxu0
    %v86 = vadd.f32 %v46, %v85
    %87 = vmatmul.f32.gmra.mxu0 %v56
    %v88 = vpop.f32.mrf.mxu0
    %v89 = vadd.f32 %v46, %v88
    %90 = vmatmul.f32.gmra.mxu0 %v59
    %v91 = vpop.f32.mrf.mxu0
    %v92 = vadd.f32 %v46, %v91
    %93 = vdwg.mxu0
    %v94 = vmax.f32 %v83, 0.0
    %v95 = vmax.f32 %v86, 0.0
    %v96 = vmax.f32 %v89, 0.0
    %v97 = vmax.f32 %v92, 0.0
    %s98 = scalar_lea.vmem [#allocation2], 32
    %v99 = vld [vmem:[%s98] sm:$0xff]
    %s100 = scalar_lea.vmem %s2, 1
    %v101 = vld [vmem:[%s100] sm:$0x1]
    %v103 = vperm.slane %v101, 0
    %vm105 = vcmask 64512
    %v107 = vsel %vm105, %v94, 0
    %v110 = vsel %vm105, %v95, 0
    %v113 = vsel %vm105, %v96, 0
    %v116 = vsel %vm105, %v97, 0
    %118 = vmatpush.msra.mxu0 0.0
    %119 = vmatpush.msra.mxu0 0.0
    %120 = vmatpush.msra.mxu0 0.0
    %121 = vmatpush.msra.mxu0 0.0
    %122 = vmatpush.msra.mxu0 0.0
    %123 = vmatpush.msra.mxu0 0.0
    %124 = vmatpush.msra.mxu0 0.0
    %125 = vmatpush.msra.mxu0 0.0
    %126 = vmatpush.msra.mxu0 0.0
    %127 = vmatpush.msra.mxu0 0.0
    %128 = vmatpush.msra.mxu0 0.0
    %129 = vmatpush.msra.mxu0 0.0
    %130 = vmatpush.msra.mxu0 0.0
    %131 = vmatpush.msra.mxu0 0.0
    %132 = vmatpush.msra.mxu0 0.0
    %133 = vmatpush.msra.mxu0 %v99
    %134 = vmatmul.f32.gmra.mxu0 %v107
    %v135 = vpop.f32.mrf.mxu0
    %v136 = vadd.f32 %v103, %v135
    %137 = vmatmul.f32.gmra.mxu0 %v110
    %v138 = vpop.f32.mrf.mxu0
    %v139 = vadd.f32 %v103, %v138
    %140 = vmatmul.f32.gmra.mxu0 %v113
    %v141 = vpop.f32.mrf.mxu0
    %v142 = vadd.f32 %v103, %v141
    %143 = vmatmul.f32.gmra.mxu0 %v116
    %v144 = vpop.f32.mrf.mxu0
    %v145 = vadd.f32 %v103, %v144
    %146 = vdwg.mxu0
    %v147 = vmax.f32 %v136, 0.0
    %v148 = vmax.f32 %v139, 0.0
    %v149 = vmax.f32 %v142, 0.0
    %v150 = vmax.f32 %v145, 0.0
    %s151 = scalar_lea.vmem [#allocation2], 64
    %v152 = vld [vmem:[%s151] sm:$0xff]
    %v153 = vld [vmem:[%s151 + $0x8] sm:$0xff]
    %s154 = scalar_lea.vmem %s2, 2
    %v155 = vld [vmem:[%s154] sm:$0x1]
    %v157 = vperm.slane %v155, 0
    %vm159 = vcmask 130048
    %v161 = vsel %vm159, %v147, 0
    %v164 = vsel %vm159, %v148, 0
    %v167 = vsel %vm159, %v149, 0
    %v170 = vsel %vm159, %v150, 0
    %172 = vmatpush.msra.mxu0 0.0
    %173 = vmatpush.msra.mxu0 0.0
    %174 = vmatpush.msra.mxu0 0.0
    %175 = vmatpush.msra.mxu0 0.0
    %176 = vmatpush.msra.mxu0 0.0
    %177 = vmatpush.msra.mxu0 0.0
    %178 = vmatpush.msra.mxu0 0.0
    %179 = vmatpush.msra.mxu0 0.0
    %180 = vmatpush.msra.mxu0 0.0
    %181 = vmatpush.msra.mxu0 0.0
    %182 = vmatpush.msra.mxu0 0.0
    %183 = vmatpush.msra.mxu0 0.0
    %184 = vmatpush.msra.mxu0 0.0
    %185 = vmatpush.msra.mxu0 0.0
    %186 = vmatpush.msra.mxu0 %v153
    %187 = vmatpush.msra.mxu0 %v152
    %188 = vmatmul.f32.gmra.mxu0 %v161
    %v189 = vpop.f32.mrf.mxu0
    %v190 = vadd.f32 %v157, %v189
    %191 = vmatmul.f32.gmra.mxu0 %v164
    %v192 = vpop.f32.mrf.mxu0
    %v193 = vadd.f32 %v157, %v192
    %194 = vmatmul.f32.gmra.mxu0 %v167
    %v195 = vpop.f32.mrf.mxu0
    %v196 = vadd.f32 %v157, %v195
    %197 = vmatmul.f32.gmra.mxu0 %v170
    %v198 = vpop.f32.mrf.mxu0
    %v199 = vadd.f32 %v157, %v198
    %200 = vdwg.mxu0
    %v201 = vmax.f32 %v190, 0.0
    %v202 = vmax.f32 %v193, 0.0
    %v203 = vmax.f32 %v196, 0.0
    %v204 = vmax.f32 %v199, 0.0
    %vm205 = vcmask 261120
    %v206 = vsel %vm205, %v201, -inf
    %v207 = vrot.slane %v206, 4
    %v208 = vmax.f32 %v206, %v207
    %v209 = vrot.slane %v208, 2
    %v210 = vmax.f32 %v208, %v209
    %v211 = vrot.slane %v210, 1
    %v212 = vmax.f32 %v210, %v211
    %v213 = vsel %vm205, %v202, -inf
    %v214 = vrot.slane %v213, 4
    %v215 = vmax.f32 %v213, %v214
    %v216 = vrot.slane %v215, 2
    %v217 = vmax.f32 %v215, %v216
    %v218 = vrot.slane %v217, 1
    %v219 = vmax.f32 %v217, %v218
    %v220 = vsel %vm205, %v203, -inf
    %v221 = vrot.slane %v220, 4
    %v222 = vmax.f32 %v220, %v221
    %v223 = vrot.slane %v222, 2
    %v224 = vmax.f32 %v222, %v223
    %v225 = vrot.slane %v224, 1
    %v226 = vmax.f32 %v224, %v225
    %v227 = vsel %vm205, %v204, -inf
    %v228 = vrot.slane %v227, 4
    %v229 = vmax.f32 %v227, %v228
    %v230 = vrot.slane %v229, 2
    %v231 = vmax.f32 %v229, %v230
    %v232 = vrot.slane %v231, 1
    %v233 = vmax.f32 %v231, %v232
    %s234 = scalar_lea.vmem [#allocation2], 96
    %v235 = vld [vmem:[%s234] sm:$0xff]
    %v236 = vld [vmem:[%s234 + $0x8] sm:$0xff]
    %v237 = vld [vmem:[%s234 + $0x10] sm:$0xff]
    %v238 = vld [vmem:[%s234 + $0x18] sm:$0xff]
    %s239 = scalar_lea.vmem %s2, 3
    %v240 = vld [vmem:[%s239] sm:$0x1]
    %v242 = vperm.slane %v240, 0
    %v245 = vsel %vm205, %v212, 0
    %v248 = vsel %vm205, %v219, 0
    %v251 = vsel %vm205, %v226, 0
    %v254 = vsel %vm205, %v233, 0
    %256 = vmatpush.msra.mxu0 0.0
    %257 = vmatpush.msra.mxu0 0.0
    %258 = vmatpush.msra.mxu0 0.0
    %259 = vmatpush.msra.mxu0 0.0
    %260 = vmatpush.msra.mxu0 0.0
    %261 = vmatpush.msra.mxu0 0.0
    %262 = vmatpush.msra.mxu0 0.0
    %263 = vmatpush.msra.mxu0 0.0
    %264 = vmatpush.msra.mxu0 0.0
    %265 = vmatpush.msra.mxu0 0.0
    %266 = vmatpush.msra.mxu0 0.0
    %267 = vmatpush.msra.mxu0 0.0
    %268 = vmatpush.msra.mxu0 %v238
    %269 = vmatpush.msra.mxu0 %v237
    %270 = vmatpush.msra.mxu0 %v236
    %271 = vmatpush.msra.mxu0 %v235
    %272 = vmatmul.f32.gmra.mxu0 %v245
    %v273 = vpop.f32.mrf.mxu0
    %v274 = vadd.f32 %v242, %v273
    %275 = vmatmul.f32.gmra.mxu0 %v248
    %v276 = vpop.f32.mrf.mxu0
    %v277 = vadd.f32 %v242, %v276
    %278 = vmatmul.f32.gmra.mxu0 %v251
    %v279 = vpop.f32.mrf.mxu0
    %v280 = vadd.f32 %v242, %v279
    %281 = vmatmul.f32.gmra.mxu0 %v254
    %v282 = vpop.f32.mrf.mxu0
    %v283 = vadd.f32 %v242, %v282
    %284 = vdwg.mxu0
    %v285 = vmax.f32 %v274, 0.0
    %v286 = vmax.f32 %v277, 0.0
    %v287 = vmax.f32 %v280, 0.0
    %v288 = vmax.f32 %v283, 0.0
    %s289 = scalar_lea.vmem [#allocation2], 128
    %v290 = vld [vmem:[%s289] sm:$0xff]
    %v291 = vld [vmem:[%s289 + $0x8] sm:$0xff]
    %s292 = scalar_lea.vmem %s2, 4
    %v293 = vld [vmem:[%s292] sm:$0x1]
    %v295 = vperm.slane %v293, 0
    %v298 = vsel %vm159, %v285, 0
    %v301 = vsel %vm159, %v286, 0
    %v304 = vsel %vm159, %v287, 0
    %v307 = vsel %vm159, %v288, 0
    %309 = vmatpush.msra.mxu0 0.0
    %310 = vmatpush.msra.mxu0 0.0
    %311 = vmatpush.msra.mxu0 0.0
    %312 = vmatpush.msra.mxu0 0.0
    %313 = vmatpush.msra.mxu0 0.0
    %314 = vmatpush.msra.mxu0 0.0
    %315 = vmatpush.msra.mxu0 0.0
    %316 = vmatpush.msra.mxu0 0.0
    %317 = vmatpush.msra.mxu0 0.0
    %318 = vmatpush.msra.mxu0 0.0
    %319 = vmatpush.msra.mxu0 0.0
    %320 = vmatpush.msra.mxu0 0.0
    %321 = vmatpush.msra.mxu0 0.0
    %322 = vmatpush.msra.mxu0 0.0
    %323 = vmatpush.msra.mxu0 %v291
    %324 = vmatpush.msra.mxu0 %v290
    %325 = vmatmul.f32.gmra.mxu0 %v298
    %v326 = vpop.f32.mrf.mxu0
    %v327 = vadd.f32 %v295, %v326
    %328 = vmatmul.f32.gmra.mxu0 %v301
    %v329 = vpop.f32.mrf.mxu0
    %v330 = vadd.f32 %v295, %v329
    %331 = vmatmul.f32.gmra.mxu0 %v304
    %v332 = vpop.f32.mrf.mxu0
    %v333 = vadd.f32 %v295, %v332
    %334 = vmatmul.f32.gmra.mxu0 %v307
    %v335 = vpop.f32.mrf.mxu0
    %v336 = vadd.f32 %v295, %v335
    %337 = vdwg.mxu0
    %v338 = vmax.f32 %v327, 0.0
    %v339 = vmax.f32 %v330, 0.0
    %v340 = vmax.f32 %v333, 0.0
    %v341 = vmax.f32 %v336, 0.0
    %s342 = scalar_lea.vmem [#allocation2], 160
    %v343 = vld [vmem:[%s342] sm:$0xff]
    %s344 = scalar_lea.vmem %s2, 5
    %v345 = vld [vmem:[%s344] sm:$0x1]
    %v347 = vperm.slane %v345, 0
    %v350 = vsel %vm105, %v338, 0
    %v353 = vsel %vm105, %v339, 0
    %v356 = vsel %vm105, %v340, 0
    %v359 = vsel %vm105, %v341, 0
    %361 = vmatpush.msra.mxu0 0.0
    %362 = vmatpush.msra.mxu0 0.0
    %363 = vmatpush.msra.mxu0 0.0
    %364 = vmatpush.msra.mxu0 0.0
    %365 = vmatpush.msra.mxu0 0.0
    %366 = vmatpush.msra.mxu0 0.0
    %367 = vmatpush.msra.mxu0 0.0
    %368 = vmatpush.msra.mxu0 0.0
    %369 = vmatpush.msra.mxu0 0.0
    %370 = vmatpush.msra.mxu0 0.0
    %371 = vmatpush.msra.mxu0 0.0
    %372 = vmatpush.msra.mxu0 0.0
    %373 = vmatpush.msra.mxu0 0.0
    %374 = vmatpush.msra.mxu0 0.0
    %375 = vmatpush.msra.mxu0 0.0
    %376 = vmatpush.msra.mxu0 %v343
    %377 = vmatmul.f32.gmra.mxu0 %v350
    %v378 = vpop.f32.mrf.mxu0
    %v379 = vadd.f32 %v347, %v378
    %380 = vmatmul.f32.gmra.mxu0 %v353
    %v381 = vpop.f32.mrf.mxu0
    %v382 = vadd.f32 %v347, %v381
    %383 = vmatmul.f32.gmra.mxu0 %v356
    %v384 = vpop.f32.mrf.mxu0
    %v385 = vadd.f32 %v347, %v384
    %386 = vmatmul.f32.gmra.mxu0 %v359
    %v387 = vpop.f32.mrf.mxu0
    %v388 = vadd.f32 %v347, %v387
    %389 = vdwg.mxu0
    %390 = vset.pattern.permute.xlu0 0
    %391 = vperm.xlu0 %390, %v39
    %v392 = vpop.permute.xlu0 %391
    %394 = vset.pattern.permute.xlu0 0
    %395 = vperm.xlu0 %394, %v40
    %v396 = vpop.permute.xlu0 %395
    %398 = vset.pattern.permute.xlu0 0
    %399 = vperm.xlu0 %398, %v41
    %v400 = vpop.permute.xlu0 %399
    %402 = vset.pattern.permute.xlu0 0
    %403 = vperm.xlu0 %402, %v42
    %v404 = vpop.permute.xlu0 %403
    %v406 = vmul.f32 %v392, %v379
    %v407 = vmul.f32 %v396, %v382
    %v408 = vmul.f32 %v400, %v385
    %v409 = vmul.f32 %v404, %v388
    %v410 = vadd.f32 %v39, %v406
    %v411 = vadd.f32 %v40, %v407
    %v412 = vadd.f32 %v41, %v408
    %v413 = vadd.f32 %v42, %v409
    %414 = vset.pattern.permute.xlu0 1
    %415 = vperm.xlu0 %414, %v39
    %v416 = vpop.permute.xlu0 %415
    %418 = vset.pattern.permute.xlu0 1
    %419 = vperm.xlu0 %418, %v40
    %v420 = vpop.permute.xlu0 %419
    %422 = vset.pattern.permute.xlu0 1
    %423 = vperm.xlu0 %422, %v41
    %v424 = vpop.permute.xlu0 %423
    %426 = vset.pattern.permute.xlu0 1
    %427 = vperm.xlu0 %426, %v42
    %v428 = vpop.permute.xlu0 %427
    %v430 = vmul.f32 %v416, %v379
    %v431 = vmul.f32 %v420, %v382
    %v432 = vmul.f32 %v424, %v385
    %v433 = vmul.f32 %v428, %v388
    %438 = vrot.lane.b32.xlu0 %v430, 125
    %v439 = vpop.permute.xlu0 %438
    %440 = vrot.lane.b32.xlu0 %v431, 125
    %v441 = vpop.permute.xlu0 %440
    %442 = vrot.lane.b32.xlu0 %v432, 125
    %v443 = vpop.permute.xlu0 %442
    %444 = vrot.lane.b32.xlu0 %v433, 125
    %v445 = vpop.permute.xlu0 %444
    %v450 = vadd.f32 %v410, %v439
    %v451 = vadd.f32 %v411, %v441
    %v452 = vadd.f32 %v412, %v443
    %v453 = vadd.f32 %v413, %v445
    %454 = vset.pattern.permute.xlu0 2
    %455 = vperm.xlu0 %454, %v39
    %v456 = vpop.permute.xlu0 %455
    %458 = vset.pattern.permute.xlu0 2
    %459 = vperm.xlu0 %458, %v40
    %v460 = vpop.permute.xlu0 %459
    %462 = vset.pattern.permute.xlu0 2
    %463 = vperm.xlu0 %462, %v41
    %v464 = vpop.permute.xlu0 %463
    %466 = vset.pattern.permute.xlu0 2
    %467 = vperm.xlu0 %466, %v42
    %v468 = vpop.permute.xlu0 %467
    %v470 = vmul.f32 %v456, %v379
    %v471 = vmul.f32 %v460, %v382
    %v472 = vmul.f32 %v464, %v385
    %v473 = vmul.f32 %v468, %v388
    %478 = vrot.lane.b32.xlu0 %v470, 122
    %v479 = vpop.permute.xlu0 %478
    %480 = vrot.lane.b32.xlu0 %v471, 122
    %v481 = vpop.permute.xlu0 %480
    %482 = vrot.lane.b32.xlu0 %v472, 122
    %v483 = vpop.permute.xlu0 %482
    %484 = vrot.lane.b32.xlu0 %v473, 122
    %v485 = vpop.permute.xlu0 %484
    %v490 = vadd.f32 %v450, %v479
    %v491 = vadd.f32 %v451, %v481
    %v492 = vadd.f32 %v452, %v483
    %v493 = vadd.f32 %v453, %v485
    %s494 = scalar_lea.vmem [#allocation2], 384
    %v495 = vld [vmem:[%s494] sm:$0xff]
    %s496 = scalar_lea.vmem %s2, 12
    %v497 = vld [vmem:[%s496] sm:$0x1]
    %v499 = vperm.slane %v497, 0
    %v502 = vsel %vm48, %v490, 0
    %v505 = vsel %vm48, %v491, 0
    %v508 = vsel %vm48, %v492, 0
    %v511 = vsel %vm48, %v493, 0
    %v514 = vsel %vm61, %v495, 0
    %516 = vmatpush.msra.mxu0 0.0
    %517 = vmatpush.msra.mxu0 0.0
    %518 = vmatpush.msra.mxu0 0.0
    %519 = vmatpush.msra.mxu0 0.0
    %520 = vmatpush.msra.mxu0 0.0
    %521 = vmatpush.msra.mxu0 0.0
    %522 = vmatpush.msra.mxu0 0.0
    %523 = vmatpush.msra.mxu0 0.0
    %524 = vmatpush.msra.mxu0 0.0
    %525 = vmatpush.msra.mxu0 0.0
    %526 = vmatpush.msra.mxu0 0.0
    %527 = vmatpush.msra.mxu0 0.0
    %528 = vmatpush.msra.mxu0 0.0
    %529 = vmatpush.msra.mxu0 0.0
    %530 = vmatpush.msra.mxu0 0.0
    %531 = vmatpush.msra.mxu0 %v514
    %532 = vmatmul.f32.gmra.mxu0 %v502
    %v533 = vpop.f32.mrf.mxu0
    %v534 = vadd.f32 %v499, %v533
    %535 = vmatmul.f32.gmra.mxu0 %v505
    %v536 = vpop.f32.mrf.mxu0
    %v537 = vadd.f32 %v499, %v536
    %538 = vmatmul.f32.gmra.mxu0 %v508
    %v539 = vpop.f32.mrf.mxu0
    %v540 = vadd.f32 %v499, %v539
    %541 = vmatmul.f32.gmra.mxu0 %v511
    %v542 = vpop.f32.mrf.mxu0
    %v543 = vadd.f32 %v499, %v542
    %544 = vdwg.mxu0
    %v545 = vmax.f32 %v534, 0.0
    %v546 = vmax.f32 %v537, 0.0
    %v547 = vmax.f32 %v540, 0.0
    %v548 = vmax.f32 %v543, 0.0
    %s549 = scalar_lea.vmem [#allocation2], 192
    %v550 = vld [vmem:[%s549] sm:$0xff]
    %s551 = scalar_lea.vmem %s2, 6
    %v552 = vld [vmem:[%s551] sm:$0x1]
    %v554 = vperm.slane %v552, 0
    %v557 = vsel %vm105, %v545, 0
    %v560 = vsel %vm105, %v546, 0
    %v563 = vsel %vm105, %v547, 0
    %v566 = vsel %vm105, %v548, 0
    %568 = vmatpush.msra.mxu0 0.0
    %569 = vmatpush.msra.mxu0 0.0
    %570 = vmatpush.msra.mxu0 0.0
    %571 = vmatpush.msra.mxu0 0.0
    %572 = vmatpush.msra.mxu0 0.0
    %573 = vmatpush.msra.mxu0 0.0
    %574 = vmatpush.msra.mxu0 0.0
    %575 = vmatpush.msra.mxu0 0.0
    %576 = vmatpush.msra.mxu0 0.0
    %577 = vmatpush.msra.mxu0 0.0
    %578 = vmatpush.msra.mxu0 0.0
    %579 = vmatpush.msra.mxu0 0.0
    %580 = vmatpush.msra.mxu0 0.0
    %581 = vmatpush.msra.mxu0 0.0
    %582 = vmatpush.msra.mxu0 0.0
    %583 = vmatpush.msra.mxu0 %v550
    %584 = vmatmul.f32.gmra.mxu0 %v557
    %v585 = vpop.f32.mrf.mxu0
    %v586 = vadd.f32 %v554, %v585
    %587 = vmatmul.f32.gmra.mxu0 %v560
    %v588 = vpop.f32.mrf.mxu0
    %v589 = vadd.f32 %v554, %v588
    %590 = vmatmul.f32.gmra.mxu0 %v563
    %v591 = vpop.f32.mrf.mxu0
    %v592 = vadd.f32 %v554, %v591
    %593 = vmatmul.f32.gmra.mxu0 %v566
    %v594 = vpop.f32.mrf.mxu0
    %v595 = vadd.f32 %v554, %v594
    %596 = vdwg.mxu0
    %v597 = vmax.f32 %v586, 0.0
    %v598 = vmax.f32 %v589, 0.0
    %v599 = vmax.f32 %v592, 0.0
    %v600 = vmax.f32 %v595, 0.0
    %s601 = scalar_lea.vmem [#allocation2], 224
    %v602 = vld [vmem:[%s601] sm:$0xff]
    %s603 = scalar_lea.vmem %s2, 7
    %v604 = vld [vmem:[%s603] sm:$0x1]
    %v606 = vperm.slane %v604, 0
    %v609 = vsel %vm105, %v597, 0
    %v612 = vsel %vm105, %v598, 0
    %v615 = vsel %vm105, %v599, 0
    %v618 = vsel %vm105, %v600, 0
    %620 = vmatpush.msra.mxu0 0.0
    %621 = vmatpush.msra.mxu0 0.0
    %622 = vmatpush.msra.mxu0 0.0
    %623 = vmatpush.msra.mxu0 0.0
    %624 = vmatpush.msra.mxu0 0.0
    %625 = vmatpush.msra.mxu0 0.0
    %626 = vmatpush.msra.mxu0 0.0
    %627 = vmatpush.msra.mxu0 0.0
    %628 = vmatpush.msra.mxu0 0.0
    %629 = vmatpush.msra.mxu0 0.0
    %630 = vmatpush.msra.mxu0 0.0
    %631 = vmatpush.msra.mxu0 0.0
    %632 = vmatpush.msra.mxu0 0.0
    %633 = vmatpush.msra.mxu0 0.0
    %634 = vmatpush.msra.mxu0 0.0
    %635 = vmatpush.msra.mxu0 %v602
    %636 = vmatmul.f32.gmra.mxu0 %v609
    %v637 = vpop.f32.mrf.mxu0
    %v638 = vadd.f32 %v606, %v637
    %639 = vmatmul.f32.gmra.mxu0 %v612
    %v640 = vpop.f32.mrf.mxu0
    %v641 = vadd.f32 %v606, %v640
    %642 = vmatmul.f32.gmra.mxu0 %v615
    %v643 = vpop.f32.mrf.mxu0
    %v644 = vadd.f32 %v606, %v643
    %645 = vmatmul.f32.gmra.mxu0 %v618
    %v646 = vpop.f32.mrf.mxu0
    %v647 = vadd.f32 %v606, %v646
    %648 = vdwg.mxu0
    %v649 = vmax.f32 %v638, 0.0
    %v650 = vmax.f32 %v641, 0.0
    %v651 = vmax.f32 %v644, 0.0
    %v652 = vmax.f32 %v647, 0.0
    %s653 = scalar_lea.vmem [#allocation2], 256
    %v654 = vld [vmem:[%s653] sm:$0xff]
    %v655 = vld [vmem:[%s653 + $0x8] sm:$0xff]
    %s656 = scalar_lea.vmem %s2, 8
    %v657 = vld [vmem:[%s656] sm:$0x1]
    %v659 = vperm.slane %v657, 0
    %v662 = vsel %vm159, %v649, 0
    %v665 = vsel %vm159, %v650, 0
    %v668 = vsel %vm159, %v651, 0
    %v671 = vsel %vm159, %v652, 0
    %673 = vmatpush.msra.mxu0 0.0
    %674 = vmatpush.msra.mxu0 0.0
    %675 = vmatpush.msra.mxu0 0.0
    %676 = vmatpush.msra.mxu0 0.0
    %677 = vmatpush.msra.mxu0 0.0
    %678 = vmatpush.msra.mxu0 0.0
    %679 = vmatpush.msra.mxu0 0.0
    %680 = vmatpush.msra.mxu0 0.0
    %681 = vmatpush.msra.mxu0 0.0
    %682 = vmatpush.msra.mxu0 0.0
    %683 = vmatpush.msra.mxu0 0.0
    %684 = vmatpush.msra.mxu0 0.0
    %685 = vmatpush.msra.mxu0 0.0
    %686 = vmatpush.msra.mxu0 0.0
    %687 = vmatpush.msra.mxu0 %v655
    %688 = vmatpush.msra.mxu0 %v654
    %689 = vmatmul.f32.gmra.mxu0 %v662
    %v690 = vpop.f32.mrf.mxu0
    %v691 = vadd.f32 %v659, %v690
    %692 = vmatmul.f32.gmra.mxu0 %v665
    %v693 = vpop.f32.mrf.mxu0
    %v694 = vadd.f32 %v659, %v693
    %695 = vmatmul.f32.gmra.mxu0 %v668
    %v696 = vpop.f32.mrf.mxu0
    %v697 = vadd.f32 %v659, %v696
    %698 = vmatmul.f32.gmra.mxu0 %v671
    %v699 = vpop.f32.mrf.mxu0
    %v700 = vadd.f32 %v659, %v699
    %701 = vdwg.mxu0
    %v702 = vmax.f32 %v691, 0.0
    %v703 = vmax.f32 %v694, 0.0
    %v704 = vmax.f32 %v697, 0.0
    %v705 = vmax.f32 %v700, 0.0
    %v706 = vsel %vm205, %v702, -inf
    %v707 = vrot.slane %v706, 4
    %v708 = vmax.f32 %v706, %v707
    %v709 = vrot.slane %v708, 2
    %v710 = vmax.f32 %v708, %v709
    %v711 = vrot.slane %v710, 1
    %v712 = vmax.f32 %v710, %v711
    %v713 = vsel %vm205, %v703, -inf
    %v714 = vrot.slane %v713, 4
    %v715 = vmax.f32 %v713, %v714
    %v716 = vrot.slane %v715, 2
    %v717 = vmax.f32 %v715, %v716
    %v718 = vrot.slane %v717, 1
    %v719 = vmax.f32 %v717, %v718
    %v720 = vsel %vm205, %v704, -inf
    %v721 = vrot.slane %v720, 4
    %v722 = vmax.f32 %v720, %v721
    %v723 = vrot.slane %v722, 2
    %v724 = vmax.f32 %v722, %v723
    %v725 = vrot.slane %v724, 1
    %v726 = vmax.f32 %v724, %v725
    %v727 = vsel %vm205, %v705, -inf
    %v728 = vrot.slane %v727, 4
    %v729 = vmax.f32 %v727, %v728
    %v730 = vrot.slane %v729, 2
    %v731 = vmax.f32 %v729, %v730
    %v732 = vrot.slane %v731, 1
    %v733 = vmax.f32 %v731, %v732
    %s734 = scalar_lea.vmem [#allocation2], 288
    %v735 = vld [vmem:[%s734] sm:$0xff]
    %v736 = vld [vmem:[%s734 + $0x8] sm:$0xff]
    %v737 = vld [vmem:[%s734 + $0x10] sm:$0xff]
    %v738 = vld [vmem:[%s734 + $0x18] sm:$0xff]
    %s739 = scalar_lea.vmem %s2, 9
    %v740 = vld [vmem:[%s739] sm:$0x1]
    %v742 = vperm.slane %v740, 0
    %v745 = vsel %vm205, %v712, 0
    %v748 = vsel %vm205, %v719, 0
    %v751 = vsel %vm205, %v726, 0
    %v754 = vsel %vm205, %v733, 0
    %756 = vmatpush.msra.mxu0 0.0
    %757 = vmatpush.msra.mxu0 0.0
    %758 = vmatpush.msra.mxu0 0.0
    %759 = vmatpush.msra.mxu0 0.0
    %760 = vmatpush.msra.mxu0 0.0
    %761 = vmatpush.msra.mxu0 0.0
    %762 = vmatpush.msra.mxu0 0.0
    %763 = vmatpush.msra.mxu0 0.0
    %764 = vmatpush.msra.mxu0 0.0
    %765 = vmatpush.msra.mxu0 0.0
    %766 = vmatpush.msra.mxu0 0.0
    %767 = vmatpush.msra.mxu0 0.0
    %768 = vmatpush.msra.mxu0 %v738
    %769 = vmatpush.msra.mxu0 %v737
    %770 = vmatpush.msra.mxu0 %v736
    %771 = vmatpush.msra.mxu0 %v735
    %772 = vmatmul.f32.gmra.mxu0 %v745
    %v773 = vpop.f32.mrf.mxu0
    %v774 = vadd.f32 %v742, %v773
    %775 = vmatmul.f32.gmra.mxu0 %v748
    %v776 = vpop.f32.mrf.mxu0
    %v777 = vadd.f32 %v742, %v776
    %778 = vmatmul.f32.gmra.mxu0 %v751
    %v779 = vpop.f32.mrf.mxu0
    %v780 = vadd.f32 %v742, %v779
    %781 = vmatmul.f32.gmra.mxu0 %v754
    %v782 = vpop.f32.mrf.mxu0
    %v783 = vadd.f32 %v742, %v782
    %784 = vdwg.mxu0
    %v785 = vmax.f32 %v774, 0.0
    %v786 = vmax.f32 %v777, 0.0
    %v787 = vmax.f32 %v780, 0.0
    %v788 = vmax.f32 %v783, 0.0
    %s789 = scalar_lea.vmem [#allocation2], 320
    %v790 = vld [vmem:[%s789] sm:$0xff]
    %v791 = vld [vmem:[%s789 + $0x8] sm:$0xff]
    %s792 = scalar_lea.vmem %s2, 10
    %v793 = vld [vmem:[%s792] sm:$0x1]
    %v795 = vperm.slane %v793, 0
    %v798 = vsel %vm159, %v785, 0
    %v801 = vsel %vm159, %v786, 0
    %v804 = vsel %vm159, %v787, 0
    %v807 = vsel %vm159, %v788, 0
    %809 = vmatpush.msra.mxu0 0.0
    %810 = vmatpush.msra.mxu0 0.0
    %811 = vmatpush.msra.mxu0 0.0
    %812 = vmatpush.msra.mxu0 0.0
    %813 = vmatpush.msra.mxu0 0.0
    %814 = vmatpush.msra.mxu0 0.0
    %815 = vmatpush.msra.mxu0 0.0
    %816 = vmatpush.msra.mxu0 0.0
    %817 = vmatpush.msra.mxu0 0.0
    %818 = vmatpush.msra.mxu0 0.0
    %819 = vmatpush.msra.mxu0 0.0
    %820 = vmatpush.msra.mxu0 0.0
    %821 = vmatpush.msra.mxu0 0.0
    %822 = vmatpush.msra.mxu0 0.0
    %823 = vmatpush.msra.mxu0 %v791
    %824 = vmatpush.msra.mxu0 %v790
    %825 = vmatmul.f32.gmra.mxu0 %v798
    %v826 = vpop.f32.mrf.mxu0
    %v827 = vadd.f32 %v795, %v826
    %828 = vmatmul.f32.gmra.mxu0 %v801
    %v829 = vpop.f32.mrf.mxu0
    %v830 = vadd.f32 %v795, %v829
    %831 = vmatmul.f32.gmra.mxu0 %v804
    %v832 = vpop.f32.mrf.mxu0
    %v833 = vadd.f32 %v795, %v832
    %834 = vmatmul.f32.gmra.mxu0 %v807
    %v835 = vpop.f32.mrf.mxu0
    %v836 = vadd.f32 %v795, %v835
    %837 = vdwg.mxu0
    %v838 = vmax.f32 %v827, 0.0
    %v839 = vmax.f32 %v830, 0.0
    %v840 = vmax.f32 %v833, 0.0
    %v841 = vmax.f32 %v836, 0.0
    %s842 = scalar_lea.vmem [#allocation2], 352
    %v843 = vld [vmem:[%s842] sm:$0xff]
    %s844 = scalar_lea.vmem %s2, 11
    %v845 = vld [vmem:[%s844] sm:$0x1]
    %v847 = vperm.slane %v845, 0
    %v850 = vsel %vm105, %v838, 0
    %v853 = vsel %vm105, %v839, 0
    %v856 = vsel %vm105, %v840, 0
    %v859 = vsel %vm105, %v841, 0
    %861 = vmatpush.msra.mxu0 0.0
    %862 = vmatpush.msra.mxu0 0.0
    %863 = vmatpush.msra.mxu0 0.0
    %864 = vmatpush.msra.mxu0 0.0
    %865 = vmatpush.msra.mxu0 0.0
    %866 = vmatpush.msra.mxu0 0.0
    %867 = vmatpush.msra.mxu0 0.0
    %868 = vmatpush.msra.mxu0 0.0
    %869 = vmatpush.msra.mxu0 0.0
    %870 = vmatpush.msra.mxu0 0.0
    %871 = vmatpush.msra.mxu0 0.0
    %872 = vmatpush.msra.mxu0 0.0
    %873 = vmatpush.msra.mxu0 0.0
    %874 = vmatpush.msra.mxu0 0.0
    %875 = vmatpush.msra.mxu0 0.0
    %876 = vmatpush.msra.mxu0 %v843
    %877 = vmatmul.f32.gmra.mxu0 %v850
    %v878 = vpop.f32.mrf.mxu0
    %v879 = vadd.f32 %v847, %v878
    %880 = vmatmul.f32.gmra.mxu0 %v853
    %v881 = vpop.f32.mrf.mxu0
    %v882 = vadd.f32 %v847, %v881
    %883 = vmatmul.f32.gmra.mxu0 %v856
    %v884 = vpop.f32.mrf.mxu0
    %v885 = vadd.f32 %v847, %v884
    %886 = vmatmul.f32.gmra.mxu0 %v859
    %v887 = vpop.f32.mrf.mxu0
    %v888 = vadd.f32 %v847, %v887
    %889 = vdwg.mxu0
    %890 = vset.pattern.permute.xlu0 0
    %891 = vperm.xlu0 %890, %v545
    %v892 = vpop.permute.xlu0 %891
    %894 = vset.pattern.permute.xlu0 0
    %895 = vperm.xlu0 %894, %v546
    %v896 = vpop.permute.xlu0 %895
    %898 = vset.pattern.permute.xlu0 0
    %899 = vperm.xlu0 %898, %v547
    %v900 = vpop.permute.xlu0 %899
    %902 = vset.pattern.permute.xlu0 0
    %903 = vperm.xlu0 %902, %v548
    %v904 = vpop.permute.xlu0 %903
    %v906 = vmul.f32 %v892, %v879
    %v907 = vmul.f32 %v896, %v882
    %v908 = vmul.f32 %v900, %v885
    %v909 = vmul.f32 %v904, %v888
    %v910 = vadd.f32 %v545, %v906
    %v911 = vadd.f32 %v546, %v907
    %v912 = vadd.f32 %v547, %v908
    %v913 = vadd.f32 %v548, %v909
    %914 = vset.pattern.permute.xlu0 1
    %915 = vperm.xlu0 %914, %v545
    %v916 = vpop.permute.xlu0 %915
    %918 = vset.pattern.permute.xlu0 1
    %919 = vperm.xlu0 %918, %v546
    %v920 = vpop.permute.xlu0 %919
    %922 = vset.pattern.permute.xlu0 1
    %923 = vperm.xlu0 %922, %v547
    %v924 = vpop.permute.xlu0 %923
    %926 = vset.pattern.permute.xlu0 1
    %927 = vperm.xlu0 %926, %v548
    %v928 = vpop.permute.xlu0 %927
    %v930 = vmul.f32 %v916, %v879
    %v931 = vmul.f32 %v920, %v882
    %v932 = vmul.f32 %v924, %v885
    %v933 = vmul.f32 %v928, %v888
    %938 = vrot.lane.b32.xlu0 %v930, 120
    %v939 = vpop.permute.xlu0 %938
    %940 = vrot.lane.b32.xlu0 %v931, 120
    %v941 = vpop.permute.xlu0 %940
    %942 = vrot.lane.b32.xlu0 %v932, 120
    %v943 = vpop.permute.xlu0 %942
    %944 = vrot.lane.b32.xlu0 %v933, 120
    %v945 = vpop.permute.xlu0 %944
    %v950 = vadd.f32 %v910, %v939
    %v951 = vadd.f32 %v911, %v941
    %v952 = vadd.f32 %v912, %v943
    %v953 = vadd.f32 %v913, %v945
    %954 = vset.pattern.permute.xlu0 2
    %955 = vperm.xlu0 %954, %v545
    %v956 = vpop.permute.xlu0 %955
    %958 = vset.pattern.permute.xlu0 2
    %959 = vperm.xlu0 %958, %v546
    %v960 = vpop.permute.xlu0 %959
    %962 = vset.pattern.permute.xlu0 2
    %963 = vperm.xlu0 %962, %v547
    %v964 = vpop.permute.xlu0 %963
    %966 = vset.pattern.permute.xlu0 2
    %967 = vperm.xlu0 %966, %v548
    %v968 = vpop.permute.xlu0 %967
    %v970 = vmul.f32 %v956, %v879
    %v971 = vmul.f32 %v960, %v882
    %v972 = vmul.f32 %v964, %v885
    %v973 = vmul.f32 %v968, %v888
    %978 = vrot.lane.b32.xlu0 %v970, 112
    %v979 = vpop.permute.xlu0 %978
    %980 = vrot.lane.b32.xlu0 %v971, 112
    %v981 = vpop.permute.xlu0 %980
    %982 = vrot.lane.b32.xlu0 %v972, 112
    %v983 = vpop.permute.xlu0 %982
    %984 = vrot.lane.b32.xlu0 %v973, 112
    %v985 = vpop.permute.xlu0 %984
    %v990 = vadd.f32 %v950, %v979
    %v991 = vadd.f32 %v951, %v981
    %v992 = vadd.f32 %v952, %v983
    %v993 = vadd.f32 %v953, %v985
    %994 = vset.pattern.permute.xlu0 3
    %995 = vperm.xlu0 %994, %v545
    %v996 = vpop.permute.xlu0 %995
    %998 = vset.pattern.permute.xlu0 3
    %999 = vperm.xlu0 %998, %v546
    %v1000 = vpop.permute.xlu0 %999
    %1002 = vset.pattern.permute.xlu0 3
    %1003 = vperm.xlu0 %1002, %v547
    %v1004 = vpop.permute.xlu0 %1003
    %1006 = vset.pattern.permute.xlu0 3
    %1007 = vperm.xlu0 %1006, %v548
    %v1008 = vpop.permute.xlu0 %1007
    %v1010 = vmul.f32 %v996, %v879
    %v1011 = vmul.f32 %v1000, %v882
    %v1012 = vmul.f32 %v1004, %v885
    %v1013 = vmul.f32 %v1008, %v888
    %1018 = vrot.lane.b32.xlu0 %v1010, 104
    %v1019 = vpop.permute.xlu0 %1018
    %1020 = vrot.lane.b32.xlu0 %v1011, 104
    %v1021 = vpop.permute.xlu0 %1020
    %1022 = vrot.lane.b32.xlu0 %v1012, 104
    %v1023 = vpop.permute.xlu0 %1022
    %1024 = vrot.lane.b32.xlu0 %v1013, 104
    %v1025 = vpop.permute.xlu0 %1024
    %v1030 = vadd.f32 %v990, %v1019
    %v1031 = vadd.f32 %v991, %v1021
    %v1032 = vadd.f32 %v992, %v1023
    %v1033 = vadd.f32 %v993, %v1025
    %1034 = vset.pattern.permute.xlu0 4
    %1035 = vperm.xlu0 %1034, %v545
    %v1036 = vpop.permute.xlu0 %1035
    %1038 = vset.pattern.permute.xlu0 4
    %1039 = vperm.xlu0 %1038, %v546
    %v1040 = vpop.permute.xlu0 %1039
    %1042 = vset.pattern.permute.xlu0 4
    %1043 = vperm.xlu0 %1042, %v547
    %v1044 = vpop.permute.xlu0 %1043
    %1046 = vset.pattern.permute.xlu0 4
    %1047 = vperm.xlu0 %1046, %v548
    %v1048 = vpop.permute.xlu0 %1047
    %v1050 = vmul.f32 %v1036, %v879
    %v1051 = vmul.f32 %v1040, %v882
    %v1052 = vmul.f32 %v1044, %v885
    %v1053 = vmul.f32 %v1048, %v888
    %1058 = vrot.lane.b32.xlu0 %v1050, 96
    %v1059 = vpop.permute.xlu0 %1058
    %1060 = vrot.lane.b32.xlu0 %v1051, 96
    %v1061 = vpop.permute.xlu0 %1060
    %1062 = vrot.lane.b32.xlu0 %v1052, 96
    %v1063 = vpop.permute.xlu0 %1062
    %1064 = vrot.lane.b32.xlu0 %v1053, 96
    %v1065 = vpop.permute.xlu0 %1064
    %v1070 = vadd.f32 %v1030, %v1059
    %v1071 = vadd.f32 %v1031, %v1061
    %v1072 = vadd.f32 %v1032, %v1063
    %v1073 = vadd.f32 %v1033, %v1065
    %1074 = vset.pattern.permute.xlu0 5
    %1075 = vperm.xlu0 %1074, %v545
    %v1076 = vpop.permute.xlu0 %1075
    %1078 = vset.pattern.permute.xlu0 5
    %1079 = vperm.xlu0 %1078, %v546
    %v1080 = vpop.permute.xlu0 %1079
    %1082 = vset.pattern.permute.xlu0 5
    %1083 = vperm.xlu0 %1082, %v547
    %v1084 = vpop.permute.xlu0 %1083
    %1086 = vset.pattern.permute.xlu0 5
    %1087 = vperm.xlu0 %1086, %v548
    %v1088 = vpop.permute.xlu0 %1087
    %v1090 = vmul.f32 %v1076, %v879
    %v1091 = vmul.f32 %v1080, %v882
    %v1092 = vmul.f32 %v1084, %v885
    %v1093 = vmul.f32 %v1088, %v888
    %1098 = vrot.lane.b32.xlu0 %v1090, 88
    %v1099 = vpop.permute.xlu0 %1098
    %1100 = vrot.lane.b32.xlu0 %v1091, 88
    %v1101 = vpop.permute.xlu0 %1100
    %1102 = vrot.lane.b32.xlu0 %v1092, 88
    %v1103 = vpop.permute.xlu0 %1102
    %1104 = vrot.lane.b32.xlu0 %v1093, 88
    %v1105 = vpop.permute.xlu0 %1104
    %v1110 = vadd.f32 %v1070, %v1099
    %v1111 = vadd.f32 %v1071, %v1101
    %v1112 = vadd.f32 %v1072, %v1103
    %v1113 = vadd.f32 %v1073, %v1105
    %1114 = vset.pattern.permute.xlu0 6
    %1115 = vperm.xlu0 %1114, %v545
    %v1116 = vpop.permute.xlu0 %1115
    %1118 = vset.pattern.permute.xlu0 6
    %1119 = vperm.xlu0 %1118, %v546
    %v1120 = vpop.permute.xlu0 %1119
    %1122 = vset.pattern.permute.xlu0 6
    %1123 = vperm.xlu0 %1122, %v547
    %v1124 = vpop.permute.xlu0 %1123
    %1126 = vset.pattern.permute.xlu0 6
    %1127 = vperm.xlu0 %1126, %v548
    %v1128 = vpop.permute.xlu0 %1127
    %v1130 = vmul.f32 %v1116, %v879
    %v1131 = vmul.f32 %v1120, %v882
    %v1132 = vmul.f32 %v1124, %v885
    %v1133 = vmul.f32 %v1128, %v888
    %1138 = vrot.lane.b32.xlu0 %v1130, 80
    %v1139 = vpop.permute.xlu0 %1138
    %1140 = vrot.lane.b32.xlu0 %v1131, 80
    %v1141 = vpop.permute.xlu0 %1140
    %1142 = vrot.lane.b32.xlu0 %v1132, 80
    %v1143 = vpop.permute.xlu0 %1142
    %1144 = vrot.lane.b32.xlu0 %v1133, 80
    %v1145 = vpop.permute.xlu0 %1144
    %v1150 = vadd.f32 %v1110, %v1139
    %v1151 = vadd.f32 %v1111, %v1141
    %v1152 = vadd.f32 %v1112, %v1143
    %v1153 = vadd.f32 %v1113, %v1145
    %1154 = vset.pattern.permute.xlu0 7
    %1155 = vperm.xlu0 %1154, %v545
    %v1156 = vpop.permute.xlu0 %1155
    %1158 = vset.pattern.permute.xlu0 7
    %1159 = vperm.xlu0 %1158, %v546
    %v1160 = vpop.permute.xlu0 %1159
    %1162 = vset.pattern.permute.xlu0 7
    %1163 = vperm.xlu0 %1162, %v547
    %v1164 = vpop.permute.xlu0 %1163
    %1166 = vset.pattern.permute.xlu0 7
    %1167 = vperm.xlu0 %1166, %v548
    %v1168 = vpop.permute.xlu0 %1167
    %v1170 = vmul.f32 %v1156, %v879
    %v1171 = vmul.f32 %v1160, %v882
    %v1172 = vmul.f32 %v1164, %v885
    %v1173 = vmul.f32 %v1168, %v888
    %1178 = vrot.lane.b32.xlu0 %v1170, 72
    %v1179 = vpop.permute.xlu0 %1178
    %1180 = vrot.lane.b32.xlu0 %v1171, 72
    %v1181 = vpop.permute.xlu0 %1180
    %1182 = vrot.lane.b32.xlu0 %v1172, 72
    %v1183 = vpop.permute.xlu0 %1182
    %1184 = vrot.lane.b32.xlu0 %v1173, 72
    %v1185 = vpop.permute.xlu0 %1184
    %v1190 = vadd.f32 %v1150, %v1179
    %v1191 = vadd.f32 %v1151, %v1181
    %v1192 = vadd.f32 %v1152, %v1183
    %v1193 = vadd.f32 %v1153, %v1185
    %s1194 = scalar_lea.vmem [#allocation2], 416
    %v1195 = vld [vmem:[%s1194] sm:$0xff]
    %s1196 = scalar_lea.vmem %s2, 13
    %v1197 = vld [vmem:[%s1196] sm:$0x1]
    %v1199 = vperm.slane %v1197, 0
    %v1202 = vsel %vm105, %v1190, 0
    %v1205 = vsel %vm105, %v1191, 0
    %v1208 = vsel %vm105, %v1192, 0
    %v1211 = vsel %vm105, %v1193, 0
    %1213 = vmatpush.msra.mxu0 0.0
    %1214 = vmatpush.msra.mxu0 0.0
    %1215 = vmatpush.msra.mxu0 0.0
    %1216 = vmatpush.msra.mxu0 0.0
    %1217 = vmatpush.msra.mxu0 0.0
    %1218 = vmatpush.msra.mxu0 0.0
    %1219 = vmatpush.msra.mxu0 0.0
    %1220 = vmatpush.msra.mxu0 0.0
    %1221 = vmatpush.msra.mxu0 0.0
    %1222 = vmatpush.msra.mxu0 0.0
    %1223 = vmatpush.msra.mxu0 0.0
    %1224 = vmatpush.msra.mxu0 0.0
    %1225 = vmatpush.msra.mxu0 0.0
    %1226 = vmatpush.msra.mxu0 0.0
    %1227 = vmatpush.msra.mxu0 0.0
    %1228 = vmatpush.msra.mxu0 %v1195
    %1229 = vmatmul.f32.gmra.mxu0 %v1202
    %v1230 = vpop.f32.mrf.mxu0
    %v1231 = vadd.f32 %v1199, %v1230
    %1232 = vmatmul.f32.gmra.mxu0 %v1205
    %v1233 = vpop.f32.mrf.mxu0
    %v1234 = vadd.f32 %v1199, %v1233
    %1235 = vmatmul.f32.gmra.mxu0 %v1208
    %v1236 = vpop.f32.mrf.mxu0
    %v1237 = vadd.f32 %v1199, %v1236
    %1238 = vmatmul.f32.gmra.mxu0 %v1211
    %v1239 = vpop.f32.mrf.mxu0
    %v1240 = vadd.f32 %v1199, %v1239
    %1241 = vdwg.mxu0
    %v1242 = vmax.f32 %v1231, 0.0
    %v1243 = vmax.f32 %v1234, 0.0
    %v1244 = vmax.f32 %v1237, 0.0
    %v1245 = vmax.f32 %v1240, 0.0
    %s1246 = scalar_lea.vmem [#allocation2], 448
    %v1247 = vld [vmem:[%s1246] sm:$0xff]
    %v1248 = vld [vmem:[%s1246 + $0x8] sm:$0xff]
    %s1249 = scalar_lea.vmem %s2, 14
    %v1250 = vld [vmem:[%s1249] sm:$0x1]
    %v1252 = vperm.slane %v1250, 0
    %v1255 = vsel %vm159, %v1242, 0
    %v1258 = vsel %vm159, %v1243, 0
    %v1261 = vsel %vm159, %v1244, 0
    %v1264 = vsel %vm159, %v1245, 0
    %1266 = vmatpush.msra.mxu0 0.0
    %1267 = vmatpush.msra.mxu0 0.0
    %1268 = vmatpush.msra.mxu0 0.0
    %1269 = vmatpush.msra.mxu0 0.0
    %1270 = vmatpush.msra.mxu0 0.0
    %1271 = vmatpush.msra.mxu0 0.0
    %1272 = vmatpush.msra.mxu0 0.0
    %1273 = vmatpush.msra.mxu0 0.0
    %1274 = vmatpush.msra.mxu0 0.0
    %1275 = vmatpush.msra.mxu0 0.0
    %1276 = vmatpush.msra.mxu0 0.0
    %1277 = vmatpush.msra.mxu0 0.0
    %1278 = vmatpush.msra.mxu0 0.0
    %1279 = vmatpush.msra.mxu0 0.0
    %1280 = vmatpush.msra.mxu0 %v1248
    %1281 = vmatpush.msra.mxu0 %v1247
    %1282 = vmatmul.f32.gmra.mxu0 %v1255
    %v1283 = vpop.f32.mrf.mxu0
    %v1284 = vadd.f32 %v1252, %v1283
    %1285 = vmatmul.f32.gmra.mxu0 %v1258
    %v1286 = vpop.f32.mrf.mxu0
    %v1287 = vadd.f32 %v1252, %v1286
    %1288 = vmatmul.f32.gmra.mxu0 %v1261
    %v1289 = vpop.f32.mrf.mxu0
    %v1290 = vadd.f32 %v1252, %v1289
    %1291 = vmatmul.f32.gmra.mxu0 %v1264
    %v1292 = vpop.f32.mrf.mxu0
    %v1293 = vadd.f32 %v1252, %v1292
    %1294 = vdwg.mxu0
    %v1295 = vsel %vm205, %v1284, -inf
    %v1296 = vrot.slane %v1295, 4
    %v1297 = vmax.f32 %v1295, %v1296
    %v1298 = vrot.slane %v1297, 2
    %v1299 = vmax.f32 %v1297, %v1298
    %v1300 = vrot.slane %v1299, 1
    %v1301 = vmax.f32 %v1299, %v1300
    %v1302 = vsel %vm205, %v1287, -inf
    %v1303 = vrot.slane %v1302, 4
    %v1304 = vmax.f32 %v1302, %v1303
    %v1305 = vrot.slane %v1304, 2
    %v1306 = vmax.f32 %v1304, %v1305
    %v1307 = vrot.slane %v1306, 1
    %v1308 = vmax.f32 %v1306, %v1307
    %v1309 = vsel %vm205, %v1290, -inf
    %v1310 = vrot.slane %v1309, 4
    %v1311 = vmax.f32 %v1309, %v1310
    %v1312 = vrot.slane %v1311, 2
    %v1313 = vmax.f32 %v1311, %v1312
    %v1314 = vrot.slane %v1313, 1
    %v1315 = vmax.f32 %v1313, %v1314
    %v1316 = vsel %vm205, %v1293, -inf
    %v1317 = vrot.slane %v1316, 4
    %v1318 = vmax.f32 %v1316, %v1317
    %v1319 = vrot.slane %v1318, 2
    %v1320 = vmax.f32 %v1318, %v1319
    %v1321 = vrot.slane %v1320, 1
    %v1322 = vmax.f32 %v1320, %v1321
    %s1323 = scalar_lea.vmem [#allocation2], 480
    %v1324 = vld [vmem:[%s1323] sm:$0xff]
    %v1325 = vld [vmem:[%s1323 + $0x8] sm:$0xff]
    %v1326 = vld [vmem:[%s1323 + $0x10] sm:$0xff]
    %v1327 = vld [vmem:[%s1323 + $0x18] sm:$0xff]
    %s1328 = scalar_lea.vmem %s2, 15
    %v1329 = vld [vmem:[%s1328] sm:$0x1]
    %v1331 = vperm.slane %v1329, 0
    %v1334 = vsel %vm205, %v1301, 0
    %v1337 = vsel %vm205, %v1308, 0
    %v1340 = vsel %vm205, %v1315, 0
    %v1343 = vsel %vm205, %v1322, 0
    %1345 = vmatpush.msra.mxu0 0.0
    %1346 = vmatpush.msra.mxu0 0.0
    %1347 = vmatpush.msra.mxu0 0.0
    %1348 = vmatpush.msra.mxu0 0.0
    %1349 = vmatpush.msra.mxu0 0.0
    %1350 = vmatpush.msra.mxu0 0.0
    %1351 = vmatpush.msra.mxu0 0.0
    %1352 = vmatpush.msra.mxu0 0.0
    %1353 = vmatpush.msra.mxu0 0.0
    %1354 = vmatpush.msra.mxu0 0.0
    %1355 = vmatpush.msra.mxu0 0.0
    %1356 = vmatpush.msra.mxu0 0.0
    %1357 = vmatpush.msra.mxu0 %v1327
    %1358 = vmatpush.msra.mxu0 %v1326
    %1359 = vmatpush.msra.mxu0 %v1325
    %1360 = vmatpush.msra.mxu0 %v1324
    %1361 = vmatmul.f32.gmra.mxu0 %v1334
    %v1362 = vpop.f32.mrf.mxu0
    %v1363 = vadd.f32 %v1331, %v1362
    %1364 = vmatmul.f32.gmra.mxu0 %v1337
    %v1365 = vpop.f32.mrf.mxu0
    %v1366 = vadd.f32 %v1331, %v1365
    %1367 = vmatmul.f32.gmra.mxu0 %v1340
    %v1368 = vpop.f32.mrf.mxu0
    %v1369 = vadd.f32 %v1331, %v1368
    %1370 = vmatmul.f32.gmra.mxu0 %v1343
    %v1371 = vpop.f32.mrf.mxu0
    %v1372 = vadd.f32 %v1331, %v1371
    %1373 = vdwg.mxu0
    %v1374 = vmax.f32 %v1363, 0.0
    %v1375 = vmax.f32 %v1366, 0.0
    %v1376 = vmax.f32 %v1369, 0.0
    %v1377 = vmax.f32 %v1372, 0.0
    %s1378 = scalar_lea.vmem [#allocation2], 512
    %v1379 = vld [vmem:[%s1378] sm:$0xff]
    %v1380 = vld [vmem:[%s1378 + $0x8] sm:$0xff]
    %s1381 = scalar_lea.vmem %s2, 16
    %v1382 = vld [vmem:[%s1381] sm:$0x1]
    %v1384 = vperm.slane %v1382, 0
    %v1387 = vsel %vm159, %v1374, 0
    %v1390 = vsel %vm159, %v1375, 0
    %v1393 = vsel %vm159, %v1376, 0
    %v1396 = vsel %vm159, %v1377, 0
    %1398 = vmatpush.msra.mxu0 0.0
    %1399 = vmatpush.msra.mxu0 0.0
    %1400 = vmatpush.msra.mxu0 0.0
    %1401 = vmatpush.msra.mxu0 0.0
    %1402 = vmatpush.msra.mxu0 0.0
    %1403 = vmatpush.msra.mxu0 0.0
    %1404 = vmatpush.msra.mxu0 0.0
    %1405 = vmatpush.msra.mxu0 0.0
    %1406 = vmatpush.msra.mxu0 0.0
    %1407 = vmatpush.msra.mxu0 0.0
    %1408 = vmatpush.msra.mxu0 0.0
    %1409 = vmatpush.msra.mxu0 0.0
    %1410 = vmatpush.msra.mxu0 0.0
    %1411 = vmatpush.msra.mxu0 0.0
    %1412 = vmatpush.msra.mxu0 %v1380
    %1413 = vmatpush.msra.mxu0 %v1379
    %1414 = vmatmul.f32.gmra.mxu0 %v1387
    %v1415 = vpop.f32.mrf.mxu0
    %v1416 = vadd.f32 %v1384, %v1415
    %1417 = vmatmul.f32.gmra.mxu0 %v1390
    %v1418 = vpop.f32.mrf.mxu0
    %v1419 = vadd.f32 %v1384, %v1418
    %1420 = vmatmul.f32.gmra.mxu0 %v1393
    %v1421 = vpop.f32.mrf.mxu0
    %v1422 = vadd.f32 %v1384, %v1421
    %1423 = vmatmul.f32.gmra.mxu0 %v1396
    %v1424 = vpop.f32.mrf.mxu0
    %v1425 = vadd.f32 %v1384, %v1424
    %1426 = vdwg.mxu0
    %v1427 = vmax.f32 %v1416, 0.0
    %v1428 = vmax.f32 %v1419, 0.0
    %v1429 = vmax.f32 %v1422, 0.0
    %v1430 = vmax.f32 %v1425, 0.0
    %s1431 = scalar_lea.vmem [#allocation2], 544
    %v1432 = vld [vmem:[%s1431] sm:$0xff]
    %s1433 = scalar_lea.vmem %s2, 17
    %v1434 = vld [vmem:[%s1433] sm:$0x1]
    %v1436 = vperm.slane %v1434, 0
    %v1439 = vsel %vm105, %v1427, 0
    %v1442 = vsel %vm105, %v1428, 0
    %v1445 = vsel %vm105, %v1429, 0
    %v1448 = vsel %vm105, %v1430, 0
    %1450 = vmatpush.msra.mxu0 0.0
    %1451 = vmatpush.msra.mxu0 0.0
    %1452 = vmatpush.msra.mxu0 0.0
    %1453 = vmatpush.msra.mxu0 0.0
    %1454 = vmatpush.msra.mxu0 0.0
    %1455 = vmatpush.msra.mxu0 0.0
    %1456 = vmatpush.msra.mxu0 0.0
    %1457 = vmatpush.msra.mxu0 0.0
    %1458 = vmatpush.msra.mxu0 0.0
    %1459 = vmatpush.msra.mxu0 0.0
    %1460 = vmatpush.msra.mxu0 0.0
    %1461 = vmatpush.msra.mxu0 0.0
    %1462 = vmatpush.msra.mxu0 0.0
    %1463 = vmatpush.msra.mxu0 0.0
    %1464 = vmatpush.msra.mxu0 0.0
    %1465 = vmatpush.msra.mxu0 %v1432
    %1466 = vmatmul.f32.gmra.mxu0 %v1439
    %v1467 = vpop.f32.mrf.mxu0
    %v1468 = vadd.f32 %v1436, %v1467
    %1469 = vmatmul.f32.gmra.mxu0 %v1442
    %v1470 = vpop.f32.mrf.mxu0
    %v1471 = vadd.f32 %v1436, %v1470
    %1472 = vmatmul.f32.gmra.mxu0 %v1445
    %v1473 = vpop.f32.mrf.mxu0
    %v1474 = vadd.f32 %v1436, %v1473
    %1475 = vmatmul.f32.gmra.mxu0 %v1448
    %v1476 = vpop.f32.mrf.mxu0
    %v1477 = vadd.f32 %v1436, %v1476
    %1478 = vdwg.mxu0
    %1479 = vst [vmem:[%s3] sm:$0xff] %v1468
    %1480 = vst [vmem:[%s3 + $0x8] sm:$0xff] %v1471
    %1481 = vst [vmem:[%s3 + $0x10] sm:$0xff] %v1474
    %1482 = vst [vmem:[%s3 + $0x18] sm:$0xff] %v1477
    // Predicated region
    $region18: #{forward.1} parent=1 // pred_check
      _
    $region19: #{forward.1} parent=1 // pred_check_branch
      %1484 = sbr.rel (0) target = $region21
    $region20: #{forward.1} parent=1 // pred_region
      _
    $region21: #{forward.1} parent=1 // pred_fallthru
      _
    // Predicated region
    $region22: #{forward.1} parent=1 // pred_check
      _
    $region23: #{forward.1} parent=1 // pred_check_branch
      %1486 = sbr.rel (0) target = $region25
    $region24: #{forward.1} parent=1 // pred_region
      _
    $region25: #{forward.1} parent=1 // pred_fallthru
      _
    %1487 = vsyncpa [#allocation3], 1

</llo_original>
